<compile_context>
chip_gen: v7x
topology: tpu7x:2x2x1
jax: 0.10.0
libtpu: 0.0.40
codegen_flags: <defaults>
</compile_context>

<pallas_src>
import functools

import jax
import jax.numpy as jnp
from jax.experimental import pallas as pl
from jax.experimental.pallas import tpu as pltpu


def _tc_kernel(x_ref, w_ref, mask_ref, o_ref, prev_ref, *,
               G, gs, KK, KH, KW, W, HWp, pad, dil):
    # x_ref   : (C, HWp)        current frame t (lane-dense, lane-padded)
    # w_ref   : (C, KK)         per-channel, per-tap weights for frame t
    # mask_ref: (KK, HWp)       static boundary mask (0/1, zero on pad lanes)
    # o_ref   : (G*KK, HWp)     output tile for (n, t); row g*KK + k
    # prev_ref: (C, HWp) VMEM   carried frame max(t-1, 0)
    t = pl.program_id(1)

    cur = x_ref[...]                               # (C, HWp) -- single load

    # First frame of each clip: the "previous" frame is the frame itself.
    @pl.when(t == 0)
    def _():
        prev_ref[...] = cur

    prev = prev_ref[...]                           # (C, HWp)
    w = w_ref[...]                                 # (C, KK)
    mask = mask_ref[...]                           # (KK, HWp)

    for kh in range(KH):
        for kw in range(KW):
            k = kh * KW + kw
            # flattened-frame shift of the (kh, kw) tap
            s = (kh * dil - pad) * W + (kw * dil - pad)
            sh = s % HWp
            if sh == 0:
                cur_k = cur
            else:
                # cur_k[:, p] = cur[:, (p + s) mod HWp]  (== jnp.roll(cur, -s, 1))
                # hoisted over the FULL channel tile -> one shift per tap, not per
                # (tap, group).  pltpu.roll((HWp - sh) % HWp) is the XLU alternative.
                cur_k = jnp.concatenate([cur[:, sh:], cur[:, :sh]], axis=1)

            # two VPU multiplies; weight column lane-broadcast (C,1) -> (C,HWp)
            prod = (prev * w[:, k:k + 1]) * cur_k            # (C, HWp), f32
            m_k = mask[k:k + 1, :]                           # (1, HWp)

            for g in range(G):
                # cross-sublane sum over the aligned 32-row group window (f32, VPU/XLU)
                red = jnp.sum(prod[g * gs:(g + 1) * gs, :], axis=0, keepdims=True)
                # zero the out-of-window taps (reproduces the CUDA in-bounds guard),
                # then store the row directly -- no output packing concat.
                o_ref[g * KK + k: g * KK + k + 1, :] = (red * m_k).astype(o_ref.dtype)

    # carry the current frame: it is the "previous" frame of grid step t+1
    prev_ref[...] = cur


def temporal_correlation(x, weight, *, kernel_size=3, stride=1, padding=0,
                         dilation=1, group_size=32):
    """Pallas TPU implementation of CorrelationZeropad.forward (stride == 1)."""
    N, C, T, H, W = x.shape
    wC, wT, KH, KW = weight.shape
    assert wC == C and wT == T and KH == kernel_size and KW == kernel_size
    assert C % group_size == 0
    assert stride == 1, "only stride=1 supported"

    H_out = (H + 2 * padding - (dilation * (KH - 1) + 1)) // stride + 1
    W_out = (W + 2 * padding - (dilation * (KW - 1) + 1)) // stride + 1
    # CUDA kernel asserts H_out*W_out == H*W; with stride==1 this means 'same' size.
    assert H_out == H and W_out == W, "requires 2*padding == dilation*(kernel_size-1)"

    G = C // group_size
    gs = group_size
    KK = KH * KW
    HW = H * W
    HWp = ((HW + 127) // 128) * 128                 # lane-pad to a multiple of 128

    # ---- wrapper-side layout plumbing (lane-dense, lane-padded blocks) ----
    # frames: (N, C, T, H, W) -> (N, T, C, HWp) with HWp on lanes, zero pad lanes
    x_t = jnp.transpose(x, (0, 2, 1, 3, 4)).reshape(N, T, C, HW)
    if HWp != HW:
        x_t = jnp.pad(x_t, ((0, 0), (0, 0), (0, 0), (0, HWp - HW)))

    # weights: (C, T, KH, KW) -> (T, C, KK)
    w_t = jnp.transpose(weight.reshape(C, T, KK), (1, 0, 2)).astype(x.dtype)

    # static boundary mask: mask[kh*KW+kw, h*W+w] = 1 iff the shifted tap is in-bounds
    # (zero over the lane-pad region as well)
    hh = jnp.arange(H)[:, None]
    ww = jnp.arange(W)[None, :]
    rows = []
    for kh in range(KH):
        for kw in range(KW):
            dh = kh * dilation - padding
            dw = kw * dilation - padding
            m = (hh + dh >= 0) & (hh + dh < H) & (ww + dw >= 0) & (ww + dw < W)
            m = m.reshape(HW)
            if HWp != HW:
                m = jnp.pad(m, (0, HWp - HW))
            rows.append(m)
    mask = jnp.stack(rows, axis=0).astype(x.dtype)  # (KK, HWp)

    kernel = functools.partial(_tc_kernel, G=G, gs=gs, KK=KK, KH=KH, KW=KW,
                               W=W, HWp=HWp, pad=padding, dil=dilation)

    # explicit per-step VMEM budget (double-buffered inputs/outputs + prev carry +
    # live temporaries), clamped to v7x's 64 MiB physical VMEM
    itemsize = jnp.dtype(x.dtype).itemsize
    vmem_budget = itemsize * (
        2 * C * HWp            # x block (double-buffered)
        + 2 * C * KK           # weight block
        + 2 * KK * HWp         # mask block
        + 2 * G * KK * HWp     # output block (double-buffered)
        + C * HWp              # prev-frame carry scratch
        + 4 * C * HWp          # live temporaries (shifted frame, products) headroom
    )
    vmem_limit = int(min(max(vmem_budget, 32 << 20), 64 << 20))

    out_t = pl.pallas_call(
        kernel,
        out_shape=jax.ShapeDtypeStruct((N, T, G * KK, HWp), x.dtype),
        grid=(N, T),
        in_specs=[
            pl.BlockSpec((None, None, C, HWp), lambda n, t: (n, t, 0, 0)),
            pl.BlockSpec((None, C, KK), lambda n, t: (t, 0, 0)),
            pl.BlockSpec((KK, HWp), lambda n, t: (0, 0)),
        ],
        out_specs=pl.BlockSpec((None, None, G * KK, HWp),
                               lambda n, t: (n, t, 0, 0)),
        scratch_shapes=[pltpu.VMEM((C, HWp), x.dtype)],   # carried previous frame
        compiler_params=pltpu.CompilerParams(
            # N parallel (megacore / v7x two-TC split), T arbitrary: the prev-frame
            # carry requires T to iterate sequentially innermost; each core that
            # takes a batch slice re-initialises the carry at its own t == 0.
            dimension_semantics=("parallel", "arbitrary"),
            vmem_limit_bytes=vmem_limit),
    )(x_t, w_t, mask)

    # strip pad lanes and restore the module's (N, G*KK, T, H, W) layout
    out = out_t[..., :HW]
    out = jnp.transpose(out, (0, 2, 1, 3)).reshape(N, G * KK, T, H_out, W_out)
    return out


class TemporalCorrelation:
    """Thin mirror of the PyTorch module (forward only)."""

    def __init__(self, in_channels, out_channels, kernel_size, stride=1,
                 padding=0, dilation=1, pad_mode=0, group_size=32):
        self.kernel_size = kernel_size
        self.stride = stride
        self.padding = padding
        self.dilation = dilation
        self.group_size = group_size

    def __call__(self, x, weight):
        return temporal_correlation(
            x, weight, kernel_size=self.kernel_size, stride=self.stride,
            padding=self.padding, dilation=self.dilation, group_size=self.group_size)


def _reference(x, w, kernel_size, stride, padding, dilation, group_size):
    """Pure-JAX reference reproducing the CUDA forward kernel (for verification)."""
    N, C, T, H, W = x.shape
    K = kernel_size
    H_out = (H + 2 * padding - (dilation * (K - 1) + 1)) // stride + 1
    W_out = (W + 2 * padding - (dilation * (K - 1) + 1)) // stride + 1
    G = C // group_size
    xp = jnp.pad(x, ((0, 0), (0, 0), (0, 0), (padding, padding), (padding, padding)))
    tprev = jnp.maximum(jnp.arange(T) - 1, 0)
    x_prev = x[:, :, tprev][..., :H_out, :W_out]           # (N, C, T, H_out, W_out)
    outs = []
    for g in range(G):
        sl = slice(g * group_size, (g + 1) * group_size)
        for kh in range(K):
            for kw in range(K):
                cur = xp[:, sl, :,
                         kh * dilation: kh * dilation + H_out,
                         kw * dilation: kw * dilation + W_out]
                wk = w[None, sl, :, kh, kw][..., None, None]
                outs.append((wk * x_prev[:, sl] * cur).sum(axis=1))
    return jnp.stack(outs, axis=1)                          # (N, G*K*K, T, H_out, W_out)


if __name__ == "__main__":
    # Small, deterministic example: N=2, C=64 (group_size=32 -> 2 groups), T=4, H=W=8,
    # kernel_size=3, stride=1, padding=1, dilation=1 => output (2, 18, 4, 8, 8).
    N, C, T, H, W = 2, 64, 4, 8, 8
    kernel_size, stride, padding, dilation, group_size = 3, 1, 1, 1, 32

    key = jax.random.PRNGKey(0)
    kx, kw_ = jax.random.split(key)
    x = jax.random.normal(kx, (N, C, T, H, W), dtype=jnp.float32)
    weight = jax.random.normal(kw_, (C, T, kernel_size, kernel_size), dtype=jnp.float32) * 0.1

    mod = TemporalCorrelation(in_channels=C, out_channels=None,
                              kernel_size=kernel_size, stride=stride,
                              padding=padding, dilation=dilation,
                              group_size=group_size)
    out = mod(x, weight)
    out = jax.block_until_ready(out)

    ref = _reference(x, weight, kernel_size, stride, padding, dilation, group_size)
    assert out.shape == ref.shape, (out.shape, ref.shape)
    err = float(jnp.max(jnp.abs(out - ref)))
    assert jnp.allclose(out, ref, atol=1e-3, rtol=1e-3), err

    print("KERNEL_OK")
</pallas_src>

<mosaic_0001>
module attributes {stable_mosaic.version = 11 : i64} {
  func.func @_tc_kernel(%arg0: i32, %arg1: i32, %arg2: memref<1x1x64x128xf32, #tpu.memory_space<vmem>>, %arg3: memref<1x64x9xf32, #tpu.memory_space<vmem>>, %arg4: memref<9x128xf32, #tpu.memory_space<vmem>>, %arg5: memref<1x1x18x128xf32, #tpu.memory_space<vmem>>, %arg6: memref<64x128xf32, #tpu.memory_space<vmem>>) attributes {dimension_semantics = [#tpu.dimension_semantics<parallel>, #tpu.dimension_semantics<arbitrary>], iteration_bounds = array<i64: 2, 4>, scalar_prefetch = 0 : i64, scratch_operands = 1 : i64, tpu.core_type = #tpu.core_type<tc>, window_params = [{transform_indices = @transform_0, window_bounds = array<i64: 1, 1, 64, 128>}, {transform_indices = @transform_1, window_bounds = array<i64: 1, 64, 9>}, {pipeline_mode = #tpu.pipeline_mode<synchronous>, transform_indices = @transform_2, window_bounds = array<i64: 9, 128>}, {transform_indices = @transform_3, window_bounds = array<i64: 1, 1, 18, 128>}]} {
    %c0 = arith.constant 0 : index
    %c0_0 = arith.constant 0 : index
    %c0_1 = arith.constant 0 : index
    %c0_2 = arith.constant 0 : index
    %0 = vector.load %arg2[%c0, %c0_0, %c0_1, %c0_2] : memref<1x1x64x128xf32, #tpu.memory_space<vmem>>, vector<1x1x64x128xf32>
    %1 = vector.shape_cast %0 : vector<1x1x64x128xf32> to vector<64x128xf32>
    %c0_i32 = arith.constant 0 : i32
    %2 = arith.cmpi eq, %arg1, %c0_i32 : i32
    %3 = arith.extui %2 : i1 to i32
    %c0_i32_3 = arith.constant 0 : i32
    %4 = arith.cmpi ne, %3, %c0_i32_3 : i32
    scf.if %4 {
      %c0_85 = arith.constant 0 : index
      %c0_86 = arith.constant 0 : index
      %205 = vector.load %arg6[%c0_85, %c0_86] : memref<64x128xf32, #tpu.memory_space<vmem>>, vector<64x128xf32>
      tpu.vector_store %arg6[%c0_85, %c0_86], %1 {strides = array<i32>} : memref<64x128xf32, #tpu.memory_space<vmem>>, vector<64x128xf32>,
    } else {
    }
    %c0_4 = arith.constant 0 : index
    %c0_5 = arith.constant 0 : index
    %5 = vector.load %arg6[%c0_4, %c0_5] : memref<64x128xf32, #tpu.memory_space<vmem>>, vector<64x128xf32>
    %c0_6 = arith.constant 0 : index
    %c0_7 = arith.constant 0 : index
    %c0_8 = arith.constant 0 : index
    %6 = vector.load %arg3[%c0_6, %c0_7, %c0_8] : memref<1x64x9xf32, #tpu.memory_space<vmem>>, vector<1x64x9xf32>
    %7 = vector.shape_cast %6 : vector<1x64x9xf32> to vector<64x9xf32>
    %c0_9 = arith.constant 0 : index
    %c0_10 = arith.constant 0 : index
    %8 = vector.load %arg4[%c0_9, %c0_10] : memref<9x128xf32, #tpu.memory_space<vmem>>, vector<9x128xf32>
    %9 = vector.extract_strided_slice %1 {offsets = [0, 119], sizes = [64, 9], strides = [1, 1]} : vector<64x128xf32> to vector<64x9xf32>
    %10 = vector.extract_strided_slice %1 {offsets = [0, 0], sizes = [64, 119], strides = [1, 1]} : vector<64x128xf32> to vector<64x119xf32>
    %11 = tpu.concatenate %9, %10 in 1 : vector<64x9xf32>, vector<64x119xf32> -> vector<64x128xf32>
    %12 = vector.extract_strided_slice %7 {offsets = [0, 0], sizes = [64, 1], strides = [1, 1]} : vector<64x9xf32> to vector<64x1xf32>
    %13 = vector.broadcast %12 : vector<64x1xf32> to vector<64x128xf32>
    %14 = arith.mulf %5, %13 : vector<64x128xf32>
    %15 = arith.mulf %14, %11 : vector<64x128xf32>
    %16 = vector.extract_strided_slice %8 {offsets = [0, 0], sizes = [1, 128], strides = [1, 1]} : vector<9x128xf32> to vector<1x128xf32>
    %17 = vector.extract_strided_slice %15 {offsets = [0, 0], sizes = [32, 128], strides = [1, 1]} : vector<64x128xf32> to vector<32x128xf32>
    %cst = arith.constant dense<0.000000e+00> : vector<128xf32>
    %18 = vector.multi_reduction <add>, %17, %cst [0] : vector<32x128xf32> to vector<128xf32>
    %19 = vector.shape_cast %18 : vector<128xf32> to vector<1x128xf32>
    %20 = arith.mulf %19, %16 : vector<1x128xf32>
    %c0_11 = arith.constant 0 : index
    %c0_12 = arith.constant 0 : index
    %c0_13 = arith.constant 0 : index
    %c0_14 = arith.constant 0 : index
    %21 = vector.load %arg5[%c0_11, %c0_12, %c0_13, %c0_14] : memref<1x1x18x128xf32, #tpu.memory_space<vmem>>, vector<1x1x1x128xf32>
    %22 = vector.shape_cast %21 : vector<1x1x1x128xf32> to vector<1x128xf32>
    %23 = vector.shape_cast %20 : vector<1x128xf32> to vector<1x1x1x128xf32>
    tpu.vector_store %arg5[%c0_11, %c0_12, %c0_13, %c0_14], %23 {strides = array<i32>} : memref<1x1x18x128xf32, #tpu.memory_space<vmem>>, vector<1x1x1x128xf32>,
    %24 = vector.extract_strided_slice %15 {offsets = [32, 0], sizes = [32, 128], strides = [1, 1]} : vector<64x128xf32> to vector<32x128xf32>
    %cst_15 = arith.constant dense<0.000000e+00> : vector<128xf32>
    %25 = vector.multi_reduction <add>, %24, %cst_15 [0] : vector<32x128xf32> to vector<128xf32>
    %26 = vector.shape_cast %25 : vector<128xf32> to vector<1x128xf32>
    %27 = arith.mulf %26, %16 : vector<1x128xf32>
    %c0_16 = arith.constant 0 : index
    %c0_17 = arith.constant 0 : index
    %c9 = arith.constant 9 : index
    %c0_18 = arith.constant 0 : index
    %28 = vector.load %arg5[%c0_16, %c0_17, %c9, %c0_18] : memref<1x1x18x128xf32, #tpu.memory_space<vmem>>, vector<1x1x1x128xf32>
    %29 = vector.shape_cast %28 : vector<1x1x1x128xf32> to vector<1x128xf32>
    %30 = vector.shape_cast %27 : vector<1x128xf32> to vector<1x1x1x128xf32>
    tpu.vector_store %arg5[%c0_16, %c0_17, %c9, %c0_18], %30 {strides = array<i32>} : memref<1x1x18x128xf32, #tpu.memory_space<vmem>>, vector<1x1x1x128xf32>,
    %31 = vector.extract_strided_slice %1 {offsets = [0, 120], sizes = [64, 8], strides = [1, 1]} : vector<64x128xf32> to vector<64x8xf32>
    %32 = vector.extract_strided_slice %1 {offsets = [0, 0], sizes = [64, 120], strides = [1, 1]} : vector<64x128xf32> to vector<64x120xf32>
    %33 = tpu.concatenate %31, %32 in 1 : vector<64x8xf32>, vector<64x120xf32> -> vector<64x128xf32>
    %34 = vector.extract_strided_slice %7 {offsets = [0, 1], sizes = [64, 1], strides = [1, 1]} : vector<64x9xf32> to vector<64x1xf32>
    %35 = vector.broadcast %34 : vector<64x1xf32> to vector<64x128xf32>
    %36 = arith.mulf %5, %35 : vector<64x128xf32>
    %37 = arith.mulf %36, %33 : vector<64x128xf32>
    %38 = vector.extract_strided_slice %8 {offsets = [1, 0], sizes = [1, 128], strides = [1, 1]} : vector<9x128xf32> to vector<1x128xf32>
    %39 = vector.extract_strided_slice %37 {offsets = [0, 0], sizes = [32, 128], strides = [1, 1]} : vector<64x128xf32> to vector<32x128xf32>
    %cst_19 = arith.constant dense<0.000000e+00> : vector<128xf32>
    %40 = vector.multi_reduction <add>, %39, %cst_19 [0] : vector<32x128xf32> to vector<128xf32>
    %41 = vector.shape_cast %40 : vector<128xf32> to vector<1x128xf32>
    %42 = arith.mulf %41, %38 : vector<1x128xf32>
    %c0_20 = arith.constant 0 : index
    %c0_21 = arith.constant 0 : index
    %c1 = arith.constant 1 : index
    %c0_22 = arith.constant 0 : index
    %43 = vector.load %arg5[%c0_20, %c0_21, %c1, %c0_22] : memref<1x1x18x128xf32, #tpu.memory_space<vmem>>, vector<1x1x1x128xf32>
    %44 = vector.shape_cast %43 : vector<1x1x1x128xf32> to vector<1x128xf32>
    %45 = vector.shape_cast %42 : vector<1x128xf32> to vector<1x1x1x128xf32>
    tpu.vector_store %arg5[%c0_20, %c0_21, %c1, %c0_22], %45 {strides = array<i32>} : memref<1x1x18x128xf32, #tpu.memory_space<vmem>>, vector<1x1x1x128xf32>,
    %46 = vector.extract_strided_slice %37 {offsets = [32, 0], sizes = [32, 128], strides = [1, 1]} : vector<64x128xf32> to vector<32x128xf32>
    %cst_23 = arith.constant dense<0.000000e+00> : vector<128xf32>
    %47 = vector.multi_reduction <add>, %46, %cst_23 [0] : vector<32x128xf32> to vector<128xf32>
    %48 = vector.shape_cast %47 : vector<128xf32> to vector<1x128xf32>
    %49 = arith.mulf %48, %38 : vector<1x128xf32>
    %c0_24 = arith.constant 0 : index
    %c0_25 = arith.constant 0 : index
    %c10 = arith.constant 10 : index
    %c0_26 = arith.constant 0 : index
    %50 = vector.load %arg5[%c0_24, %c0_25, %c10, %c0_26] : memref<1x1x18x128xf32, #tpu.memory_space<vmem>>, vector<1x1x1x128xf32>
    %51 = vector.shape_cast %50 : vector<1x1x1x128xf32> to vector<1x128xf32>
    %52 = vector.shape_cast %49 : vector<1x128xf32> to vector<1x1x1x128xf32>
    tpu.vector_store %arg5[%c0_24, %c0_25, %c10, %c0_26], %52 {strides = array<i32>} : memref<1x1x18x128xf32, #tpu.memory_space<vmem>>, vector<1x1x1x128xf32>,
    %53 = vector.extract_strided_slice %1 {offsets = [0, 121], sizes = [64, 7], strides = [1, 1]} : vector<64x128xf32> to vector<64x7xf32>
    %54 = vector.extract_strided_slice %1 {offsets = [0, 0], sizes = [64, 121], strides = [1, 1]} : vector<64x128xf32> to vector<64x121xf32>
    %55 = tpu.concatenate %53, %54 in 1 : vector<64x7xf32>, vector<64x121xf32> -> vector<64x128xf32>
    %56 = vector.extract_strided_slice %7 {offsets = [0, 2], sizes = [64, 1], strides = [1, 1]} : vector<64x9xf32> to vector<64x1xf32>
    %57 = vector.broadcast %56 : vector<64x1xf32> to vector<64x128xf32>
    %58 = arith.mulf %5, %57 : vector<64x128xf32>
    %59 = arith.mulf %58, %55 : vector<64x128xf32>
    %60 = vector.extract_strided_slice %8 {offsets = [2, 0], sizes = [1, 128], strides = [1, 1]} : vector<9x128xf32> to vector<1x128xf32>
    %61 = vector.extract_strided_slice %59 {offsets = [0, 0], sizes = [32, 128], strides = [1, 1]} : vector<64x128xf32> to vector<32x128xf32>
    %cst_27 = arith.constant dense<0.000000e+00> : vector<128xf32>
    %62 = vector.multi_reduction <add>, %61, %cst_27 [0] : vector<32x128xf32> to vector<128xf32>
    %63 = vector.shape_cast %62 : vector<128xf32> to vector<1x128xf32>
    %64 = arith.mulf %63, %60 : vector<1x128xf32>
    %c0_28 = arith.constant 0 : index
    %c0_29 = arith.constant 0 : index
    %c2 = arith.constant 2 : index
    %c0_30 = arith.constant 0 : index
    %65 = vector.load %arg5[%c0_28, %c0_29, %c2, %c0_30] : memref<1x1x18x128xf32, #tpu.memory_space<vmem>>, vector<1x1x1x128xf32>
    %66 = vector.shape_cast %65 : vector<1x1x1x128xf32> to vector<1x128xf32>
    %67 = vector.shape_cast %64 : vector<1x128xf32> to vector<1x1x1x128xf32>
    tpu.vector_store %arg5[%c0_28, %c0_29, %c2, %c0_30], %67 {strides = array<i32>} : memref<1x1x18x128xf32, #tpu.memory_space<vmem>>, vector<1x1x1x128xf32>,
    %68 = vector.extract_strided_slice %59 {offsets = [32, 0], sizes = [32, 128], strides = [1, 1]} : vector<64x128xf32> to vector<32x128xf32>
    %cst_31 = arith.constant dense<0.000000e+00> : vector<128xf32>
    %69 = vector.multi_reduction <add>, %68, %cst_31 [0] : vector<32x128xf32> to vector<128xf32>
    %70 = vector.shape_cast %69 : vector<128xf32> to vector<1x128xf32>
    %71 = arith.mulf %70, %60 : vector<1x128xf32>
    %c0_32 = arith.constant 0 : index
    %c0_33 = arith.constant 0 : index
    %c11 = arith.constant 11 : index
    %c0_34 = arith.constant 0 : index
    %72 = vector.load %arg5[%c0_32, %c0_33, %c11, %c0_34] : memref<1x1x18x128xf32, #tpu.memory_space<vmem>>, vector<1x1x1x128xf32>
    %73 = vector.shape_cast %72 : vector<1x1x1x128xf32> to vector<1x128xf32>
    %74 = vector.shape_cast %71 : vector<1x128xf32> to vector<1x1x1x128xf32>
    tpu.vector_store %arg5[%c0_32, %c0_33, %c11, %c0_34], %74 {strides = array<i32>} : memref<1x1x18x128xf32, #tpu.memory_space<vmem>>, vector<1x1x1x128xf32>,
    %75 = vector.extract_strided_slice %1 {offsets = [0, 127], sizes = [64, 1], strides = [1, 1]} : vector<64x128xf32> to vector<64x1xf32>
    %76 = vector.extract_strided_slice %1 {offsets = [0, 0], sizes = [64, 127], strides = [1, 1]} : vector<64x128xf32> to vector<64x127xf32>
    %77 = tpu.concatenate %75, %76 in 1 : vector<64x1xf32>, vector<64x127xf32> -> vector<64x128xf32>
    %78 = vector.extract_strided_slice %7 {offsets = [0, 3], sizes = [64, 1], strides = [1, 1]} : vector<64x9xf32> to vector<64x1xf32>
    %79 = vector.broadcast %78 : vector<64x1xf32> to vector<64x128xf32>
    %80 = arith.mulf %5, %79 : vector<64x128xf32>
    %81 = arith.mulf %80, %77 : vector<64x128xf32>
    %82 = vector.extract_strided_slice %8 {offsets = [3, 0], sizes = [1, 128], strides = [1, 1]} : vector<9x128xf32> to vector<1x128xf32>
    %83 = vector.extract_strided_slice %81 {offsets = [0, 0], sizes = [32, 128], strides = [1, 1]} : vector<64x128xf32> to vector<32x128xf32>
    %cst_35 = arith.constant dense<0.000000e+00> : vector<128xf32>
    %84 = vector.multi_reduction <add>, %83, %cst_35 [0] : vector<32x128xf32> to vector<128xf32>
    %85 = vector.shape_cast %84 : vector<128xf32> to vector<1x128xf32>
    %86 = arith.mulf %85, %82 : vector<1x128xf32>
    %c0_36 = arith.constant 0 : index
    %c0_37 = arith.constant 0 : index
    %c3 = arith.constant 3 : index
    %c0_38 = arith.constant 0 : index
    %87 = vector.load %arg5[%c0_36, %c0_37, %c3, %c0_38] : memref<1x1x18x128xf32, #tpu.memory_space<vmem>>, vector<1x1x1x128xf32>
    %88 = vector.shape_cast %87 : vector<1x1x1x128xf32> to vector<1x128xf32>
    %89 = vector.shape_cast %86 : vector<1x128xf32> to vector<1x1x1x128xf32>
    tpu.vector_store %arg5[%c0_36, %c0_37, %c3, %c0_38], %89 {strides = array<i32>} : memref<1x1x18x128xf32, #tpu.memory_space<vmem>>, vector<1x1x1x128xf32>,
    %90 = vector.extract_strided_slice %81 {offsets = [32, 0], sizes = [32, 128], strides = [1, 1]} : vector<64x128xf32> to vector<32x128xf32>
    %cst_39 = arith.constant dense<0.000000e+00> : vector<128xf32>
    %91 = vector.multi_reduction <add>, %90, %cst_39 [0] : vector<32x128xf32> to vector<128xf32>
    %92 = vector.shape_cast %91 : vector<128xf32> to vector<1x128xf32>
    %93 = arith.mulf %92, %82 : vector<1x128xf32>
    %c0_40 = arith.constant 0 : index
    %c0_41 = arith.constant 0 : index
    %c12 = arith.constant 12 : index
    %c0_42 = arith.constant 0 : index
    %94 = vector.load %arg5[%c0_40, %c0_41, %c12, %c0_42] : memref<1x1x18x128xf32, #tpu.memory_space<vmem>>, vector<1x1x1x128xf32>
    %95 = vector.shape_cast %94 : vector<1x1x1x128xf32> to vector<1x128xf32>
    %96 = vector.shape_cast %93 : vector<1x128xf32> to vector<1x1x1x128xf32>
    tpu.vector_store %arg5[%c0_40, %c0_41, %c12, %c0_42], %96 {strides = array<i32>} : memref<1x1x18x128xf32, #tpu.memory_space<vmem>>, vector<1x1x1x128xf32>,
    %97 = vector.extract_strided_slice %7 {offsets = [0, 4], sizes = [64, 1], strides = [1, 1]} : vector<64x9xf32> to vector<64x1xf32>
    %98 = vector.broadcast %97 : vector<64x1xf32> to vector<64x128xf32>
    %99 = arith.mulf %5, %98 : vector<64x128xf32>
    %100 = arith.mulf %99, %1 : vector<64x128xf32>
    %101 = vector.extract_strided_slice %8 {offsets = [4, 0], sizes = [1, 128], strides = [1, 1]} : vector<9x128xf32> to vector<1x128xf32>
    %102 = vector.extract_strided_slice %100 {offsets = [0, 0], sizes = [32, 128], strides = [1, 1]} : vector<64x128xf32> to vector<32x128xf32>
    %cst_43 = arith.constant dense<0.000000e+00> : vector<128xf32>
    %103 = vector.multi_reduction <add>, %102, %cst_43 [0] : vector<32x128xf32> to vector<128xf32>
    %104 = vector.shape_cast %103 : vector<128xf32> to vector<1x128xf32>
    %105 = arith.mulf %104, %101 : vector<1x128xf32>
    %c0_44 = arith.constant 0 : index
    %c0_45 = arith.constant 0 : index
    %c4 = arith.constant 4 : index
    %c0_46 = arith.constant 0 : index
    %106 = vector.load %arg5[%c0_44, %c0_45, %c4, %c0_46] : memref<1x1x18x128xf32, #tpu.memory_space<vmem>>, vector<1x1x1x128xf32>
    %107 = vector.shape_cast %106 : vector<1x1x1x128xf32> to vector<1x128xf32>
    %108 = vector.shape_cast %105 : vector<1x128xf32> to vector<1x1x1x128xf32>
    tpu.vector_store %arg5[%c0_44, %c0_45, %c4, %c0_46], %108 {strides = array<i32>} : memref<1x1x18x128xf32, #tpu.memory_space<vmem>>, vector<1x1x1x128xf32>,
    %109 = vector.extract_strided_slice %100 {offsets = [32, 0], sizes = [32, 128], strides = [1, 1]} : vector<64x128xf32> to vector<32x128xf32>
    %cst_47 = arith.constant dense<0.000000e+00> : vector<128xf32>
    %110 = vector.multi_reduction <add>, %109, %cst_47 [0] : vector<32x128xf32> to vector<128xf32>
    %111 = vector.shape_cast %110 : vector<128xf32> to vector<1x128xf32>
    %112 = arith.mulf %111, %101 : vector<1x128xf32>
    %c0_48 = arith.constant 0 : index
    %c0_49 = arith.constant 0 : index
    %c13 = arith.constant 13 : index
    %c0_50 = arith.constant 0 : index
    %113 = vector.load %arg5[%c0_48, %c0_49, %c13, %c0_50] : memref<1x1x18x128xf32, #tpu.memory_space<vmem>>, vector<1x1x1x128xf32>
    %114 = vector.shape_cast %113 : vector<1x1x1x128xf32> to vector<1x128xf32>
    %115 = vector.shape_cast %112 : vector<1x128xf32> to vector<1x1x1x128xf32>
    tpu.vector_store %arg5[%c0_48, %c0_49, %c13, %c0_50], %115 {strides = array<i32>} : memref<1x1x18x128xf32, #tpu.memory_space<vmem>>, vector<1x1x1x128xf32>,
    %116 = vector.extract_strided_slice %1 {offsets = [0, 1], sizes = [64, 127], strides = [1, 1]} : vector<64x128xf32> to vector<64x127xf32>
    %117 = vector.extract_strided_slice %1 {offsets = [0, 0], sizes = [64, 1], strides = [1, 1]} : vector<64x128xf32> to vector<64x1xf32>
    %118 = tpu.concatenate %116, %117 in 1 : vector<64x127xf32>, vector<64x1xf32> -> vector<64x128xf32>
    %119 = vector.extract_strided_slice %7 {offsets = [0, 5], sizes = [64, 1], strides = [1, 1]} : vector<64x9xf32> to vector<64x1xf32>
    %120 = vector.broadcast %119 : vector<64x1xf32> to vector<64x128xf32>
    %121 = arith.mulf %5, %120 : vector<64x128xf32>
    %122 = arith.mulf %121, %118 : vector<64x128xf32>
    %123 = vector.extract_strided_slice %8 {offsets = [5, 0], sizes = [1, 128], strides = [1, 1]} : vector<9x128xf32> to vector<1x128xf32>
    %124 = vector.extract_strided_slice %122 {offsets = [0, 0], sizes = [32, 128], strides = [1, 1]} : vector<64x128xf32> to vector<32x128xf32>
    %cst_51 = arith.constant dense<0.000000e+00> : vector<128xf32>
    %125 = vector.multi_reduction <add>, %124, %cst_51 [0] : vector<32x128xf32> to vector<128xf32>
    %126 = vector.shape_cast %125 : vector<128xf32> to vector<1x128xf32>
    %127 = arith.mulf %126, %123 : vector<1x128xf32>
    %c0_52 = arith.constant 0 : index
    %c0_53 = arith.constant 0 : index
    %c5 = arith.constant 5 : index
    %c0_54 = arith.constant 0 : index
    %128 = vector.load %arg5[%c0_52, %c0_53, %c5, %c0_54] : memref<1x1x18x128xf32, #tpu.memory_space<vmem>>, vector<1x1x1x128xf32>
    %129 = vector.shape_cast %128 : vector<1x1x1x128xf32> to vector<1x128xf32>
    %130 = vector.shape_cast %127 : vector<1x128xf32> to vector<1x1x1x128xf32>
    tpu.vector_store %arg5[%c0_52, %c0_53, %c5, %c0_54], %130 {strides = array<i32>} : memref<1x1x18x128xf32, #tpu.memory_space<vmem>>, vector<1x1x1x128xf32>,
    %131 = vector.extract_strided_slice %122 {offsets = [32, 0], sizes = [32, 128], strides = [1, 1]} : vector<64x128xf32> to vector<32x128xf32>
    %cst_55 = arith.constant dense<0.000000e+00> : vector<128xf32>
    %132 = vector.multi_reduction <add>, %131, %cst_55 [0] : vector<32x128xf32> to vector<128xf32>
    %133 = vector.shape_cast %132 : vector<128xf32> to vector<1x128xf32>
    %134 = arith.mulf %133, %123 : vector<1x128xf32>
    %c0_56 = arith.constant 0 : index
    %c0_57 = arith.constant 0 : index
    %c14 = arith.constant 14 : index
    %c0_58 = arith.constant 0 : index
    %135 = vector.load %arg5[%c0_56, %c0_57, %c14, %c0_58] : memref<1x1x18x128xf32, #tpu.memory_space<vmem>>, vector<1x1x1x128xf32>
    %136 = vector.shape_cast %135 : vector<1x1x1x128xf32> to vector<1x128xf32>
    %137 = vector.shape_cast %134 : vector<1x128xf32> to vector<1x1x1x128xf32>
    tpu.vector_store %arg5[%c0_56, %c0_57, %c14, %c0_58], %137 {strides = array<i32>} : memref<1x1x18x128xf32, #tpu.memory_space<vmem>>, vector<1x1x1x128xf32>,
    %138 = vector.extract_strided_slice %1 {offsets = [0, 7], sizes = [64, 121], strides = [1, 1]} : vector<64x128xf32> to vector<64x121xf32>
    %139 = vector.extract_strided_slice %1 {offsets = [0, 0], sizes = [64, 7], strides = [1, 1]} : vector<64x128xf32> to vector<64x7xf32>
    %140 = tpu.concatenate %138, %139 in 1 : vector<64x121xf32>, vector<64x7xf32> -> vector<64x128xf32>
    %141 = vector.extract_strided_slice %7 {offsets = [0, 6], sizes = [64, 1], strides = [1, 1]} : vector<64x9xf32> to vector<64x1xf32>
    %142 = vector.broadcast %141 : vector<64x1xf32> to vector<64x128xf32>
    %143 = arith.mulf %5, %142 : vector<64x128xf32>
    %144 = arith.mulf %143, %140 : vector<64x128xf32>
    %145 = vector.extract_strided_slice %8 {offsets = [6, 0], sizes = [1, 128], strides = [1, 1]} : vector<9x128xf32> to vector<1x128xf32>
    %146 = vector.extract_strided_slice %144 {offsets = [0, 0], sizes = [32, 128], strides = [1, 1]} : vector<64x128xf32> to vector<32x128xf32>
    %cst_59 = arith.constant dense<0.000000e+00> : vector<128xf32>
    %147 = vector.multi_reduction <add>, %146, %cst_59 [0] : vector<32x128xf32> to vector<128xf32>
    %148 = vector.shape_cast %147 : vector<128xf32> to vector<1x128xf32>
    %149 = arith.mulf %148, %145 : vector<1x128xf32>
    %c0_60 = arith.constant 0 : index
    %c0_61 = arith.constant 0 : index
    %c6 = arith.constant 6 : index
    %c0_62 = arith.constant 0 : index
    %150 = vector.load %arg5[%c0_60, %c0_61, %c6, %c0_62] : memref<1x1x18x128xf32, #tpu.memory_space<vmem>>, vector<1x1x1x128xf32>
    %151 = vector.shape_cast %150 : vector<1x1x1x128xf32> to vector<1x128xf32>
    %152 = vector.shape_cast %149 : vector<1x128xf32> to vector<1x1x1x128xf32>
    tpu.vector_store %arg5[%c0_60, %c0_61, %c6, %c0_62], %152 {strides = array<i32>} : memref<1x1x18x128xf32, #tpu.memory_space<vmem>>, vector<1x1x1x128xf32>,
    %153 = vector.extract_strided_slice %144 {offsets = [32, 0], sizes = [32, 128], strides = [1, 1]} : vector<64x128xf32> to vector<32x128xf32>
    %cst_63 = arith.constant dense<0.000000e+00> : vector<128xf32>
    %154 = vector.multi_reduction <add>, %153, %cst_63 [0] : vector<32x128xf32> to vector<128xf32>
    %155 = vector.shape_cast %154 : vector<128xf32> to vector<1x128xf32>
    %156 = arith.mulf %155, %145 : vector<1x128xf32>
    %c0_64 = arith.constant 0 : index
    %c0_65 = arith.constant 0 : index
    %c15 = arith.constant 15 : index
    %c0_66 = arith.constant 0 : index
    %157 = vector.load %arg5[%c0_64, %c0_65, %c15, %c0_66] : memref<1x1x18x128xf32, #tpu.memory_space<vmem>>, vector<1x1x1x128xf32>
    %158 = vector.shape_cast %157 : vector<1x1x1x128xf32> to vector<1x128xf32>
    %159 = vector.shape_cast %156 : vector<1x128xf32> to vector<1x1x1x128xf32>
    tpu.vector_store %arg5[%c0_64, %c0_65, %c15, %c0_66], %159 {strides = array<i32>} : memref<1x1x18x128xf32, #tpu.memory_space<vmem>>, vector<1x1x1x128xf32>,
    %160 = vector.extract_strided_slice %1 {offsets = [0, 8], sizes = [64, 120], strides = [1, 1]} : vector<64x128xf32> to vector<64x120xf32>
    %161 = vector.extract_strided_slice %1 {offsets = [0, 0], sizes = [64, 8], strides = [1, 1]} : vector<64x128xf32> to vector<64x8xf32>
    %162 = tpu.concatenate %160, %161 in 1 : vector<64x120xf32>, vector<64x8xf32> -> vector<64x128xf32>
    %163 = vector.extract_strided_slice %7 {offsets = [0, 7], sizes = [64, 1], strides = [1, 1]} : vector<64x9xf32> to vector<64x1xf32>
    %164 = vector.broadcast %163 : vector<64x1xf32> to vector<64x128xf32>
    %165 = arith.mulf %5, %164 : vector<64x128xf32>
    %166 = arith.mulf %165, %162 : vector<64x128xf32>
    %167 = vector.extract_strided_slice %8 {offsets = [7, 0], sizes = [1, 128], strides = [1, 1]} : vector<9x128xf32> to vector<1x128xf32>
    %168 = vector.extract_strided_slice %166 {offsets = [0, 0], sizes = [32, 128], strides = [1, 1]} : vector<64x128xf32> to vector<32x128xf32>
    %cst_67 = arith.constant dense<0.000000e+00> : vector<128xf32>
    %169 = vector.multi_reduction <add>, %168, %cst_67 [0] : vector<32x128xf32> to vector<128xf32>
    %170 = vector.shape_cast %169 : vector<128xf32> to vector<1x128xf32>
    %171 = arith.mulf %170, %167 : vector<1x128xf32>
    %c0_68 = arith.constant 0 : index
    %c0_69 = arith.constant 0 : index
    %c7 = arith.constant 7 : index
    %c0_70 = arith.constant 0 : index
    %172 = vector.load %arg5[%c0_68, %c0_69, %c7, %c0_70] : memref<1x1x18x128xf32, #tpu.memory_space<vmem>>, vector<1x1x1x128xf32>
    %173 = vector.shape_cast %172 : vector<1x1x1x128xf32> to vector<1x128xf32>
    %174 = vector.shape_cast %171 : vector<1x128xf32> to vector<1x1x1x128xf32>
    tpu.vector_store %arg5[%c0_68, %c0_69, %c7, %c0_70], %174 {strides = array<i32>} : memref<1x1x18x128xf32, #tpu.memory_space<vmem>>, vector<1x1x1x128xf32>,
    %175 = vector.extract_strided_slice %166 {offsets = [32, 0], sizes = [32, 128], strides = [1, 1]} : vector<64x128xf32> to vector<32x128xf32>
    %cst_71 = arith.constant dense<0.000000e+00> : vector<128xf32>
    %176 = vector.multi_reduction <add>, %175, %cst_71 [0] : vector<32x128xf32> to vector<128xf32>
    %177 = vector.shape_cast %176 : vector<128xf32> to vector<1x128xf32>
    %178 = arith.mulf %177, %167 : vector<1x128xf32>
    %c0_72 = arith.constant 0 : index
    %c0_73 = arith.constant 0 : index
    %c16 = arith.constant 16 : index
    %c0_74 = arith.constant 0 : index
    %179 = vector.load %arg5[%c0_72, %c0_73, %c16, %c0_74] : memref<1x1x18x128xf32, #tpu.memory_space<vmem>>, vector<1x1x1x128xf32>
    %180 = vector.shape_cast %179 : vector<1x1x1x128xf32> to vector<1x128xf32>
    %181 = vector.shape_cast %178 : vector<1x128xf32> to vector<1x1x1x128xf32>
    tpu.vector_store %arg5[%c0_72, %c0_73, %c16, %c0_74], %181 {strides = array<i32>} : memref<1x1x18x128xf32, #tpu.memory_space<vmem>>, vector<1x1x1x128xf32>,
    %182 = vector.extract_strided_slice %1 {offsets = [0, 9], sizes = [64, 119], strides = [1, 1]} : vector<64x128xf32> to vector<64x119xf32>
    %183 = vector.extract_strided_slice %1 {offsets = [0, 0], sizes = [64, 9], strides = [1, 1]} : vector<64x128xf32> to vector<64x9xf32>
    %184 = tpu.concatenate %182, %183 in 1 : vector<64x119xf32>, vector<64x9xf32> -> vector<64x128xf32>
    %185 = vector.extract_strided_slice %7 {offsets = [0, 8], sizes = [64, 1], strides = [1, 1]} : vector<64x9xf32> to vector<64x1xf32>
    %186 = vector.broadcast %185 : vector<64x1xf32> to vector<64x128xf32>
    %187 = arith.mulf %5, %186 : vector<64x128xf32>
    %188 = arith.mulf %187, %184 : vector<64x128xf32>
    %189 = vector.extract_strided_slice %8 {offsets = [8, 0], sizes = [1, 128], strides = [1, 1]} : vector<9x128xf32> to vector<1x128xf32>
    %190 = vector.extract_strided_slice %188 {offsets = [0, 0], sizes = [32, 128], strides = [1, 1]} : vector<64x128xf32> to vector<32x128xf32>
    %cst_75 = arith.constant dense<0.000000e+00> : vector<128xf32>
    %191 = vector.multi_reduction <add>, %190, %cst_75 [0] : vector<32x128xf32> to vector<128xf32>
    %192 = vector.shape_cast %191 : vector<128xf32> to vector<1x128xf32>
    %193 = arith.mulf %192, %189 : vector<1x128xf32>
    %c0_76 = arith.constant 0 : index
    %c0_77 = arith.constant 0 : index
    %c8 = arith.constant 8 : index
    %c0_78 = arith.constant 0 : index
    %194 = vector.load %arg5[%c0_76, %c0_77, %c8, %c0_78] : memref<1x1x18x128xf32, #tpu.memory_space<vmem>>, vector<1x1x1x128xf32>
    %195 = vector.shape_cast %194 : vector<1x1x1x128xf32> to vector<1x128xf32>
    %196 = vector.shape_cast %193 : vector<1x128xf32> to vector<1x1x1x128xf32>
    tpu.vector_store %arg5[%c0_76, %c0_77, %c8, %c0_78], %196 {strides = array<i32>} : memref<1x1x18x128xf32, #tpu.memory_space<vmem>>, vector<1x1x1x128xf32>,
    %197 = vector.extract_strided_slice %188 {offsets = [32, 0], sizes = [32, 128], strides = [1, 1]} : vector<64x128xf32> to vector<32x128xf32>
    %cst_79 = arith.constant dense<0.000000e+00> : vector<128xf32>
    %198 = vector.multi_reduction <add>, %197, %cst_79 [0] : vector<32x128xf32> to vector<128xf32>
    %199 = vector.shape_cast %198 : vector<128xf32> to vector<1x128xf32>
    %200 = arith.mulf %199, %189 : vector<1x128xf32>
    %c0_80 = arith.constant 0 : index
    %c0_81 = arith.constant 0 : index
    %c17 = arith.constant 17 : index
    %c0_82 = arith.constant 0 : index
    %201 = vector.load %arg5[%c0_80, %c0_81, %c17, %c0_82] : memref<1x1x18x128xf32, #tpu.memory_space<vmem>>, vector<1x1x1x128xf32>
    %202 = vector.shape_cast %201 : vector<1x1x1x128xf32> to vector<1x128xf32>
    %203 = vector.shape_cast %200 : vector<1x128xf32> to vector<1x1x1x128xf32>
    tpu.vector_store %arg5[%c0_80, %c0_81, %c17, %c0_82], %203 {strides = array<i32>} : memref<1x1x18x128xf32, #tpu.memory_space<vmem>>, vector<1x1x1x128xf32>,
    %c0_83 = arith.constant 0 : index
    %c0_84 = arith.constant 0 : index
    %204 = vector.load %arg6[%c0_83, %c0_84] : memref<64x128xf32, #tpu.memory_space<vmem>>, vector<64x128xf32>
    tpu.vector_store %arg6[%c0_83, %c0_84], %1 {strides = array<i32>} : memref<64x128xf32, #tpu.memory_space<vmem>>, vector<64x128xf32>,
    return
  }
  func.func @transform_0(%arg0: i32, %arg1: i32) -> (i32, i32, i32, i32) {
    %c0_i32 = arith.constant 0 : i32
    %c0_i32_0 = arith.constant 0 : i32
    %c0_i32_1 = arith.constant 0 : i32
    return %arg0, %arg1, %c0_i32, %c0_i32_0 : i32, i32, i32, i32
  }
  func.func @transform_1(%arg0: i32, %arg1: i32) -> (i32, i32, i32) {
    %c0_i32 = arith.constant 0 : i32
    %c0_i32_0 = arith.constant 0 : i32
    %c0_i32_1 = arith.constant 0 : i32
    return %arg1, %c0_i32, %c0_i32_0 : i32, i32, i32
  }
  func.func @transform_2(%arg0: i32, %arg1: i32) -> (i32, i32) {
    %c0_i32 = arith.constant 0 : i32
    %c0_i32_0 = arith.constant 0 : i32
    %c0_i32_1 = arith.constant 0 : i32
    return %c0_i32, %c0_i32_0 : i32, i32
  }
  func.func @transform_3(%arg0: i32, %arg1: i32) -> (i32, i32, i32, i32) {
    %c0_i32 = arith.constant 0 : i32
    %c0_i32_0 = arith.constant 0 : i32
    %c0_i32_1 = arith.constant 0 : i32
    return %arg0, %arg1, %c0_i32, %c0_i32_0 : i32, i32, i32, i32
  }
}

</mosaic_0001>

<llo_original>
// kernel: tpu_custom_call.1
$region0: #{tpu_custom_call.1}
  #allocation0 [shape = 'u32[]', space=smem, size = 0x4, offset = 0x4, fixed_abs, tag = 'smem constant byte address 0x4 - core index']
  #allocation1 [shape = 'u32[144,128]{1,0:T(1,128)}', space=vmem, size = 0x12000, scoped, tag = 'internal scratch']
  #allocation2 [shape = 'f32[64,128]{1,0:T(8,128)}', space=vmem, size = 0x8000, scoped, tag = 'scratch operand']
  %s0 = inlined_call_operand.hbm [shape: f32[2,4,64,128], index: 0, kind: input, shape index: {}]
  %s1 = inlined_call_operand.vmem [shape: f32[4,64,9], index: 1, kind: input, shape index: {}]
  %s2 = inlined_call_operand.vmem [shape: f32[9,128], index: 2, kind: input, shape index: {}]
  %s3 = inlined_call_operand.vmem [shape: f32[2,4,18,128], index: 3, kind: output, shape index: {}]
  %s4 = sld [smem:[#allocation0]]
  $region53: #{tpu_custom_call.1} parent=0
    _
  %s6 = ssub.s32 1, %s4
  %s7 = scalar_select 0, %s6, %s4
  $region1: #{tpu_custom_call.1} parent=0
    #allocation3 [shape = 'u8[65536]{0}', space=vmem, size = 0x10000, scoped, tag = 'input window, operand 0']
    #allocation4 [shape = 's32[2]{0}', space=sflag, size = 0x8, scoped, tag = 'scoped memory for tpu_custom_call.1']
    %8 = vsyncpa [#allocation4], 0
    %s9 = scalar_lea.sflag [#allocation4], 1
    %10 = vsyncpa %s9, 0
    loop: start=0, step=1, limit=10
    $region2: #{tpu_custom_call.1} parent=1 // loop_pre_header
      _
    $region3: #{tpu_custom_call.1} parent=1 // loop_header
      %s12 = sphi 0, %s16
      %p13 = scmp.ge.s32.totalorder %s12, 10
      %s19 = sphi 0, %s31
      %s20 = sphi 0, %s27
      %s21 = sphi 0, %s19
      %s22 = sphi 0, %s20
      %s23 = sphi 0, %s21
      %s24 = sphi 0, %s22
      %s36 = sphi 0, %s38
      %s39 = sphi 0, %s36
      %s40 = sphi 0, %s39
      %s56 = sphi 0, %s40
      %s62 = sphi 0, %s64
      %s65 = sphi 0, %s62
      %s66 = sphi 0, %s65
      %s82 = sphi 0, %s66
      %s86 = sphi 0, %s86
      %s88 = sphi 0, %s86
      %s89 = sphi 0, %s88
      %s103 = sphi 0, %s89
      %s111 = sphi 0, %s113
      %s114 = sphi 0, %s111
      %s115 = sphi 0, %s114
      %s131 = sphi 0, %s115
    $region4: #{tpu_custom_call.1} parent=1 // loop_header_branch
      %15 = sbr.rel (%p13) target = $region8
    $region5: #{tpu_custom_call.1} parent=1 // loop_body
      %s17 = ssub.s32 %s12, 1
      %s18 = ssub.s32 %s12, 2
      %s25 = sadd.s32 1, %s20
      %p26 = scmp.ge.s32.totalorder %s25, 4
      %s27 = scalar_select %p26, 0, %s25
      %s28 = sadd.s32 1, %s19
      %s29 = scalar_select %p26, %s28, %s19
      %p30 = scmp.ge.s32.totalorder %s29, 2
      %s31 = scalar_select %p30, 0, %s29
      %s32 = ssub.s32 %s19, %s31
      %s33 = ssub.s32 %s20, %s27
      %s34 = sor.u32 %s32, %s33
      %p35 = scmp.eq.s32.totalorder %s34, 0
      %s37 = sadd.s32 %s36, 1
      %s38 = scalar_select %p35, %s36, %s37
      %p41 = pneg %p35
      %p42 = scmp.eq.s32.totalorder %s12, 7
      %p43 = por %p41, %p42
      %p44 = scmp.ne.s32.totalorder %s36, %s39
      %p45 = scmp.eq.s32.totalorder %s12, 0
      %p46 = por %p44, %p45
      %p47 = scmp.ne.s32.totalorder %s36, %s39
      %p48 = scmp.eq.s32.totalorder %s17, 7
      %p49 = por %p47, %p48
      %p50 = scmp.ne.s32.totalorder %s39, %s40
      %p51 = scmp.eq.s32.totalorder %s17, 0
      %p52 = por %p50, %p51
      %p53 = scmp.ne.s32.totalorder %s39, %s40
      %p54 = scmp.eq.s32.totalorder %s18, 7
      %p55 = por %p53, %p54
      %p57 = scmp.ne.s32.totalorder %s40, %s56
      %p58 = scmp.eq.s32.totalorder %s18, 0
      %p59 = por %p57, %p58
      %s60 = ssub.s32 %s20, %s27
      %p61 = scmp.eq.s32.totalorder %s60, 0
      %s63 = sadd.s32 %s62, 1
      %s64 = scalar_select %p61, %s62, %s63
      %p67 = pneg %p61
      %p68 = scmp.eq.s32.totalorder %s12, 7
      %p69 = por %p67, %p68
      %p70 = scmp.ne.s32.totalorder %s62, %s65
      %p71 = scmp.eq.s32.totalorder %s12, 0
      %p72 = por %p70, %p71
      %p73 = scmp.ne.s32.totalorder %s62, %s65
      %p74 = scmp.eq.s32.totalorder %s17, 7
      %p75 = por %p73, %p74
      %p76 = scmp.ne.s32.totalorder %s65, %s66
      %p77 = scmp.eq.s32.totalorder %s17, 0
      %p78 = por %p76, %p77
      %p79 = scmp.ne.s32.totalorder %s65, %s66
      %p80 = scmp.eq.s32.totalorder %s18, 7
      %p81 = por %p79, %p80
      %p83 = scmp.ne.s32.totalorder %s66, %s82
      %p84 = scmp.eq.s32.totalorder %s18, 0
      %p85 = por %p83, %p84
      %s87 = sadd.s32 %s86, 1
      %p90 = scmp.eq.s32.totalorder %s12, 7
      %p91 = scmp.ne.s32.totalorder %s86, %s88
      %p92 = scmp.eq.s32.totalorder %s12, 0
      %p93 = por %p91, %p92
      %p94 = scmp.ne.s32.totalorder %s86, %s88
      %p95 = scmp.eq.s32.totalorder %s17, 7
      %p96 = por %p94, %p95
      %p97 = scmp.ne.s32.totalorder %s88, %s89
      %p98 = scmp.eq.s32.totalorder %s17, 0
      %p99 = por %p97, %p98
      %p100 = scmp.ne.s32.totalorder %s88, %s89
      %p101 = scmp.eq.s32.totalorder %s18, 7
      %p102 = por %p100, %p101
      %p104 = scmp.ne.s32.totalorder %s89, %s103
      %p105 = scmp.eq.s32.totalorder %s18, 0
      %p106 = por %p104, %p105
      %s107 = ssub.s32 %s19, %s31
      %s108 = ssub.s32 %s20, %s27
      %s109 = sor.u32 %s107, %s108
      %p110 = scmp.eq.s32.totalorder %s109, 0
      %s112 = sadd.s32 %s111, 1
      %s113 = scalar_select %p110, %s111, %s112
      %p116 = pneg %p110
      %p117 = scmp.eq.s32.totalorder %s12, 7
      %p118 = por %p116, %p117
      %p119 = scmp.ne.s32.totalorder %s111, %s114
      %p120 = scmp.eq.s32.totalorder %s12, 0
      %p121 = por %p119, %p120
      %p122 = scmp.ne.s32.totalorder %s111, %s114
      %p123 = scmp.eq.s32.totalorder %s17, 7
      %p124 = por %p122, %p123
      %p125 = scmp.ne.s32.totalorder %s114, %s115
      %p126 = scmp.eq.s32.totalorder %s17, 0
      %p127 = por %p125, %p126
      %p128 = scmp.ne.s32.totalorder %s114, %s115
      %p129 = scmp.eq.s32.totalorder %s18, 7
      %p130 = por %p128, %p129
      %p132 = scmp.ne.s32.totalorder %s115, %s131
      %p133 = scmp.eq.s32.totalorder %s18, 0
      %p134 = por %p132, %p133
      %p135 = scmp.le.s32.totalorder 1, %s12
      %p136 = scmp.lt.s32.totalorder %s12, 9
      %p137 = pnand %p135, %p136
      %p138 = pneg %p137
      // Predicated region
      $region9: #{tpu_custom_call.1} parent=5 // pred_check
        _
      $region10: #{tpu_custom_call.1} parent=5 // pred_check_branch
        %140 = sbr.rel (%p137) target = $region12
      $region11: #{tpu_custom_call.1} parent=5 // pred_region
        %s141 = ssub.s32 %s12, 1
        // Predicated region
        $region13: #{tpu_custom_call.1} parent=11 // pred_check
          %p142 = pneg %p99
        $region14: #{tpu_custom_call.1} parent=11 // pred_check_branch
          %144 = sbr.rel (%p142) target = $region16
        $region15: #{tpu_custom_call.1} parent=11 // pred_region
          _
        $region16: #{tpu_custom_call.1} parent=11 // pred_fallthru
          _
      $region12: #{tpu_custom_call.1} parent=5 // pred_fallthru
        _
      %p145 = scmp.lt.s32.totalorder %s12, 8
      // Predicated region
      $region17: #{tpu_custom_call.1} parent=5 // pred_check
        %p146 = pneg %p145
      $region18: #{tpu_custom_call.1} parent=5 // pred_check_branch
        %148 = sbr.rel (%p146) target = $region20
      $region19: #{tpu_custom_call.1} parent=5 // pred_region
        // Predicated region
        $region21: #{tpu_custom_call.1} parent=19 // pred_check
          %p149 = pneg %p46
        $region22: #{tpu_custom_call.1} parent=19 // pred_check_branch
          %151 = sbr.rel (%p149) target = $region24
        $region23: #{tpu_custom_call.1} parent=19 // pred_region
          %s152 = sand.u32 %s36, 1
          %s153 = scalar_lea.sflag [#allocation4], %s152
          %s154 = sand.u32 %s36, 1
          %s155 = smul.addr %s154, 64
          %s156 = scalar_lea.vmem [#allocation3], %s155
          %s158 = ssub.s32 1024, 1024
          %159 = vsyncadd %s153, %s158
          %s160 = smul.addr %s20, 8
          %s161 = smul.addr %s19, 32
          %s162 = sadd.s32 %s160, %s161
          %s163 = smul.addr %s162, 128
          %s164 = scalar_lea.hbm %s0, %s163
          %s165 = sshll.u32 %s156, 4
          %s166 = int_to_ptr.vmem [resolvable:$true] %s165
          %171 = dma.hbm_to_vmem [thread:$0]  %s164, 1024, %s166, %s153, 128, 128, 8
        $region24: #{tpu_custom_call.1} parent=19 // pred_fallthru
          _
        // Predicated region
        $region25: #{tpu_custom_call.1} parent=19 // pred_check
          %p172 = pneg %p72
        $region26: #{tpu_custom_call.1} parent=19 // pred_check_branch
          %174 = sbr.rel (%p172) target = $region28
        $region27: #{tpu_custom_call.1} parent=19 // pred_region
          %p175 = scmp.lt.s32.totalorder %s20, 3
          %s176 = scalar_select %p175, %s20, 3
          %s177 = smul.addr %s176, 8
          %s178 = smul.addr %s177, 8
          %s179 = scalar_lea.vmem %s1, %s178
        $region28: #{tpu_custom_call.1} parent=19 // pred_fallthru
          _
      $region20: #{tpu_custom_call.1} parent=5 // pred_fallthru
        _
      %p180 = scmp.le.s32.totalorder 1, %s12
      %p181 = scmp.lt.s32.totalorder %s12, 9
      %p182 = pnand %p180, %p181
      %p183 = pneg %p182
      // Predicated region
      $region29: #{tpu_custom_call.1} parent=5 // pred_check
        _
      $region30: #{tpu_custom_call.1} parent=5 // pred_check_branch
        %185 = sbr.rel (%p182) target = $region32
      $region31: #{tpu_custom_call.1} parent=5 // pred_region
        %s186 = ssub.s32 %s12, 1
        %s187 = sand.u32 %s39, 1
        %s188 = scalar_lea.sflag [#allocation4], %s187
        %s189 = sand.u32 %s39, 1
        %s190 = smul.addr %s189, 64
        %s191 = scalar_lea.vmem [#allocation3], %s190
        // Predicated region
        $region33: #{tpu_custom_call.1} parent=31 // pred_check
          %p192 = pneg %p52
        $region34: #{tpu_custom_call.1} parent=31 // pred_check_branch
          %194 = sbr.rel (%p192) target = $region36
        $region35: #{tpu_custom_call.1} parent=31 // pred_region
          %195 = dma.done %s188, 1024
        $region36: #{tpu_custom_call.1} parent=31 // pred_fallthru
          _
        %s196 = sand.u32 %s39, 1
        %s197 = scalar_lea.sflag [#allocation4], %s196
        %s198 = sand.u32 %s39, 1
        %s199 = smul.addr %s198, 64
        %s200 = scalar_lea.vmem [#allocation3], %s199
        %p201 = pneg %p52
        %p202 = pneg %p49
        %p203 = scmp.lt.s32.totalorder %s22, 3
        %s204 = scalar_select %p203, %s22, 3
        %s205 = smul.addr %s204, 8
        %s206 = smul.addr %s205, 8
        %s207 = scalar_lea.vmem %s1, %s206
        %p208 = pneg %p78
        %p209 = pneg %p75
        %p210 = pneg %p99
        %p211 = pneg %p96
        %p212 = pneg %p127
        %p213 = pneg %p124
        %p214 = scmp.lt.s32.totalorder %s21, 1
        %s215 = scalar_select %p214, %s21, 1
        %p216 = scmp.lt.s32.totalorder %s22, 3
        %s217 = scalar_select %p216, %s22, 3
        %s218 = smul.addr %s217, 3
        %s219 = smul.addr %s215, 12
        %s220 = sadd.s32 %s218, %s219
        %s221 = smul.addr %s220, 8
        %s222 = scalar_lea.vmem %s3, %s221
        %p223 = scmp.lt.s32.totalorder %s22, 3
        %s224 = scalar_select %p223, %s22, 3
        %s225 = smul.addr %s224, 8
        %s226 = smul.addr %s225, 8
        %s227 = scalar_lea.vmem %s1, %s226
        %p228 = scmp.lt.s32.totalorder %s21, 1
        %s229 = scalar_select %p228, %s21, 1
        %p230 = scmp.lt.s32.totalorder %s22, 3
        %s231 = scalar_select %p230, %s22, 3
        %s232 = smul.addr %s231, 3
        %s233 = smul.addr %s229, 12
        %s234 = sadd.s32 %s232, %s233
        %s235 = smul.addr %s234, 8
        %s236 = scalar_lea.vmem %s3, %s235
        %v237 = vld [vmem:[%s191] sm:$0xff]
        %v238 = vld [vmem:[%s191 + $0x8] sm:$0xff]
        %v239 = vld [vmem:[%s191 + $0x10] sm:$0xff]
        %v240 = vld [vmem:[%s191 + $0x18] sm:$0xff]
        %v241 = vld [vmem:[%s191 + $0x20] sm:$0xff]
        %v242 = vld [vmem:[%s191 + $0x28] sm:$0xff]
        %v243 = vld [vmem:[%s191 + $0x30] sm:$0xff]
        %v244 = vld [vmem:[%s191 + $0x38] sm:$0xff]
        %p245 = scmp.eq.s32.totalorder %s22, 0
        // Predicated region
        $region37: #{tpu_custom_call.1} parent=31 // pred_check
          %p246 = pneg %p245
        $region38: #{tpu_custom_call.1} parent=31 // pred_check_branch
          %248 = sbr.rel (%p246) target = $region40
        $region39: #{tpu_custom_call.1} parent=31 // pred_region
          %249 = vst [vmem:[#allocation2] sm:$0xff] %v237
          %250 = vst [vmem:[#allocation2 + $0x8] sm:$0xff] %v238
          %251 = vst [vmem:[#allocation2 + $0x10] sm:$0xff] %v239
          %252 = vst [vmem:[#allocation2 + $0x18] sm:$0xff] %v240
          %253 = vst [vmem:[#allocation2 + $0x20] sm:$0xff] %v241
          %254 = vst [vmem:[#allocation2 + $0x28] sm:$0xff] %v242
          %255 = vst [vmem:[#allocation2 + $0x30] sm:$0xff] %v243
          %256 = vst [vmem:[#allocation2 + $0x38] sm:$0xff] %v244
        $region40: #{tpu_custom_call.1} parent=31 // pred_fallthru
          _
        %v257 = vld [vmem:[#allocation2] sm:$0xff]
        %v258 = vld [vmem:[#allocation2 + $0x8] sm:$0xff]
        %v259 = vld [vmem:[#allocation2 + $0x10] sm:$0xff]
        %v260 = vld [vmem:[#allocation2 + $0x18] sm:$0xff]
        %v261 = vld [vmem:[#allocation2 + $0x20] sm:$0xff]
        %v262 = vld [vmem:[#allocation2 + $0x28] sm:$0xff]
        %v263 = vld [vmem:[#allocation2 + $0x30] sm:$0xff]
        %v264 = vld [vmem:[#allocation2 + $0x38] sm:$0xff]
        %v265 = vld [vmem:[%s227] sm:$0xff]
        %v266 = vld [vmem:[%s227 + $0x8] sm:$0xff]
        %v267 = vld [vmem:[%s227 + $0x10] sm:$0xff]
        %v268 = vld [vmem:[%s227 + $0x18] sm:$0xff]
        %v269 = vld [vmem:[%s227 + $0x20] sm:$0xff]
        %v270 = vld [vmem:[%s227 + $0x28] sm:$0xff]
        %v271 = vld [vmem:[%s227 + $0x30] sm:$0xff]
        %v272 = vld [vmem:[%s227 + $0x38] sm:$0xff]
        %v273 = vld [vmem:[%s2] sm:$0xff]
        %v274 = vld [vmem:[%s2 + $0x8] sm:$0x1]
        %283 = vrot.lane.b32.xlu0 %v237, 9
        %v284 = vpop.permute.xlu0 %283
        %285 = vrot.lane.b32.xlu0 %v238, 9
        %v286 = vpop.permute.xlu0 %285
        %287 = vrot.lane.b32.xlu0 %v239, 9
        %v288 = vpop.permute.xlu0 %287
        %289 = vrot.lane.b32.xlu0 %v240, 9
        %v290 = vpop.permute.xlu0 %289
        %291 = vrot.lane.b32.xlu0 %v241, 9
        %v292 = vpop.permute.xlu0 %291
        %293 = vrot.lane.b32.xlu0 %v242, 9
        %v294 = vpop.permute.xlu0 %293
        %295 = vrot.lane.b32.xlu0 %v243, 9
        %v296 = vpop.permute.xlu0 %295
        %297 = vrot.lane.b32.xlu0 %v244, 9
        %v298 = vpop.permute.xlu0 %297
        %308 = vset.pattern.permute.xlu0 0
        %309 = vperm.xlu0 %308, %v265
        %v310 = vpop.permute.xlu0 %309
        %313 = vset.pattern.permute.xlu0 0
        %314 = vperm.xlu0 %313, %v266
        %v315 = vpop.permute.xlu0 %314
        %318 = vset.pattern.permute.xlu0 0
        %319 = vperm.xlu0 %318, %v267
        %v320 = vpop.permute.xlu0 %319
        %323 = vset.pattern.permute.xlu0 0
        %324 = vperm.xlu0 %323, %v268
        %v325 = vpop.permute.xlu0 %324
        %328 = vset.pattern.permute.xlu0 0
        %329 = vperm.xlu0 %328, %v269
        %v330 = vpop.permute.xlu0 %329
        %333 = vset.pattern.permute.xlu0 0
        %334 = vperm.xlu0 %333, %v270
        %v335 = vpop.permute.xlu0 %334
        %338 = vset.pattern.permute.xlu0 0
        %339 = vperm.xlu0 %338, %v271
        %v340 = vpop.permute.xlu0 %339
        %343 = vset.pattern.permute.xlu0 0
        %344 = vperm.xlu0 %343, %v272
        %v345 = vpop.permute.xlu0 %344
        %v347 = vmul.f32 %v257, %v310
        %v348 = vmul.f32 %v258, %v315
        %v349 = vmul.f32 %v259, %v320
        %v350 = vmul.f32 %v260, %v325
        %v351 = vmul.f32 %v261, %v330
        %v352 = vmul.f32 %v262, %v335
        %v353 = vmul.f32 %v263, %v340
        %v354 = vmul.f32 %v264, %v345
        %v355 = vmul.f32 %v347, %v284
        %v356 = vmul.f32 %v348, %v286
        %v357 = vmul.f32 %v349, %v288
        %v358 = vmul.f32 %v350, %v290
        %v359 = vmul.f32 %v351, %v292
        %v360 = vmul.f32 %v352, %v294
        %v361 = vmul.f32 %v353, %v296
        %v362 = vmul.f32 %v354, %v298
        %v363 = vadd.f32 %v355, %v356
        %v364 = vadd.f32 %v363, %v357
        %v365 = vadd.f32 %v364, %v358
        %v366 = vrot.slane %v365, 4
        %v367 = vadd.f32 %v365, %v366
        %v368 = vrot.slane %v367, 2
        %v369 = vadd.f32 %v367, %v368
        %v370 = vrot.slane %v369, 1
        %v371 = vadd.f32 %v369, %v370
        %v372 = vmul.f32 %v371, %v273
        %373 = vst [vmem:[%s236] sm:$0x1] %v372
        %v374 = vadd.f32 %v359, %v360
        %v375 = vadd.f32 %v374, %v361
        %v376 = vadd.f32 %v375, %v362
        %v377 = vrot.slane %v376, 4
        %v378 = vadd.f32 %v376, %v377
        %v379 = vrot.slane %v378, 2
        %v380 = vadd.f32 %v378, %v379
        %v381 = vrot.slane %v380, 1
        %v382 = vadd.f32 %v380, %v381
        %v383 = vmul.f32 %v382, %v273
        %384 = vst [vmem:[%s236 + $0x9] sm:$0x1] %v383
        %385 = vrot.lane.b32.xlu0 %v237, 8
        %v386 = vpop.permute.xlu0 %385
        %387 = vrot.lane.b32.xlu0 %v238, 8
        %v388 = vpop.permute.xlu0 %387
        %389 = vrot.lane.b32.xlu0 %v239, 8
        %v390 = vpop.permute.xlu0 %389
        %391 = vrot.lane.b32.xlu0 %v240, 8
        %v392 = vpop.permute.xlu0 %391
        %393 = vrot.lane.b32.xlu0 %v241, 8
        %v394 = vpop.permute.xlu0 %393
        %395 = vrot.lane.b32.xlu0 %v242, 8
        %v396 = vpop.permute.xlu0 %395
        %397 = vrot.lane.b32.xlu0 %v243, 8
        %v398 = vpop.permute.xlu0 %397
        %399 = vrot.lane.b32.xlu0 %v244, 8
        %v400 = vpop.permute.xlu0 %399
        %409 = vset.pattern.permute.xlu0 1
        %410 = vperm.xlu0 %409, %v265
        %v411 = vpop.permute.xlu0 %410
        %413 = vset.pattern.permute.xlu0 1
        %414 = vperm.xlu0 %413, %v266
        %v415 = vpop.permute.xlu0 %414
        %417 = vset.pattern.permute.xlu0 1
        %418 = vperm.xlu0 %417, %v267
        %v419 = vpop.permute.xlu0 %418
        %421 = vset.pattern.permute.xlu0 1
        %422 = vperm.xlu0 %421, %v268
        %v423 = vpop.permute.xlu0 %422
        %425 = vset.pattern.permute.xlu0 1
        %426 = vperm.xlu0 %425, %v269
        %v427 = vpop.permute.xlu0 %426
        %429 = vset.pattern.permute.xlu0 1
        %430 = vperm.xlu0 %429, %v270
        %v431 = vpop.permute.xlu0 %430
        %433 = vset.pattern.permute.xlu0 1
        %434 = vperm.xlu0 %433, %v271
        %v435 = vpop.permute.xlu0 %434
        %437 = vset.pattern.permute.xlu0 1
        %438 = vperm.xlu0 %437, %v272
        %v439 = vpop.permute.xlu0 %438
        %v441 = vmul.f32 %v257, %v411
        %v442 = vmul.f32 %v258, %v415
        %v443 = vmul.f32 %v259, %v419
        %v444 = vmul.f32 %v260, %v423
        %v445 = vmul.f32 %v261, %v427
        %v446 = vmul.f32 %v262, %v431
        %v447 = vmul.f32 %v263, %v435
        %v448 = vmul.f32 %v264, %v439
        %v449 = vmul.f32 %v441, %v386
        %v450 = vmul.f32 %v442, %v388
        %v451 = vmul.f32 %v443, %v390
        %v452 = vmul.f32 %v444, %v392
        %v453 = vmul.f32 %v445, %v394
        %v454 = vmul.f32 %v446, %v396
        %v455 = vmul.f32 %v447, %v398
        %v456 = vmul.f32 %v448, %v400
        %v457 = vadd.f32 %v449, %v450
        %v458 = vadd.f32 %v457, %v451
        %v459 = vadd.f32 %v458, %v452
        %v460 = vrot.slane %v459, 4
        %v461 = vadd.f32 %v459, %v460
        %v462 = vrot.slane %v461, 2
        %v463 = vadd.f32 %v461, %v462
        %v464 = vrot.slane %v463, 1
        %v465 = vadd.f32 %v463, %v464
        %v466 = vmul.f32 %v465, %v273
        %467 = vst [vmem:[%s236] sm:$0x2] %v466
        %v468 = vadd.f32 %v453, %v454
        %v469 = vadd.f32 %v468, %v455
        %v470 = vadd.f32 %v469, %v456
        %v471 = vrot.slane %v470, 4
        %v472 = vadd.f32 %v470, %v471
        %v473 = vrot.slane %v472, 2
        %v474 = vadd.f32 %v472, %v473
        %v475 = vrot.slane %v474, 1
        %v476 = vadd.f32 %v474, %v475
        %v477 = vmul.f32 %v476, %v273
        %478 = vst [vmem:[%s236 + $0x9] sm:$0x2] %v477
        %479 = vrot.lane.b32.xlu0 %v237, 7
        %v480 = vpop.permute.xlu0 %479
        %481 = vrot.lane.b32.xlu0 %v238, 7
        %v482 = vpop.permute.xlu0 %481
        %483 = vrot.lane.b32.xlu0 %v239, 7
        %v484 = vpop.permute.xlu0 %483
        %485 = vrot.lane.b32.xlu0 %v240, 7
        %v486 = vpop.permute.xlu0 %485
        %487 = vrot.lane.b32.xlu0 %v241, 7
        %v488 = vpop.permute.xlu0 %487
        %489 = vrot.lane.b32.xlu0 %v242, 7
        %v490 = vpop.permute.xlu0 %489
        %491 = vrot.lane.b32.xlu0 %v243, 7
        %v492 = vpop.permute.xlu0 %491
        %493 = vrot.lane.b32.xlu0 %v244, 7
        %v494 = vpop.permute.xlu0 %493
        %503 = vset.pattern.permute.xlu0 2
        %504 = vperm.xlu0 %503, %v265
        %v505 = vpop.permute.xlu0 %504
        %507 = vset.pattern.permute.xlu0 2
        %508 = vperm.xlu0 %507, %v266
        %v509 = vpop.permute.xlu0 %508
        %511 = vset.pattern.permute.xlu0 2
        %512 = vperm.xlu0 %511, %v267
        %v513 = vpop.permute.xlu0 %512
        %515 = vset.pattern.permute.xlu0 2
        %516 = vperm.xlu0 %515, %v268
        %v517 = vpop.permute.xlu0 %516
        %519 = vset.pattern.permute.xlu0 2
        %520 = vperm.xlu0 %519, %v269
        %v521 = vpop.permute.xlu0 %520
        %523 = vset.pattern.permute.xlu0 2
        %524 = vperm.xlu0 %523, %v270
        %v525 = vpop.permute.xlu0 %524
        %527 = vset.pattern.permute.xlu0 2
        %528 = vperm.xlu0 %527, %v271
        %v529 = vpop.permute.xlu0 %528
        %531 = vset.pattern.permute.xlu0 2
        %532 = vperm.xlu0 %531, %v272
        %v533 = vpop.permute.xlu0 %532
        %v535 = vmul.f32 %v257, %v505
        %v536 = vmul.f32 %v258, %v509
        %v537 = vmul.f32 %v259, %v513
        %v538 = vmul.f32 %v260, %v517
        %v539 = vmul.f32 %v261, %v521
        %v540 = vmul.f32 %v262, %v525
        %v541 = vmul.f32 %v263, %v529
        %v542 = vmul.f32 %v264, %v533
        %v543 = vmul.f32 %v535, %v480
        %v544 = vmul.f32 %v536, %v482
        %v545 = vmul.f32 %v537, %v484
        %v546 = vmul.f32 %v538, %v486
        %v547 = vmul.f32 %v539, %v488
        %v548 = vmul.f32 %v540, %v490
        %v549 = vmul.f32 %v541, %v492
        %v550 = vmul.f32 %v542, %v494
        %v551 = vadd.f32 %v543, %v544
        %v552 = vadd.f32 %v551, %v545
        %v553 = vadd.f32 %v552, %v546
        %v554 = vrot.slane %v553, 4
        %v555 = vadd.f32 %v553, %v554
        %v556 = vrot.slane %v555, 2
        %v557 = vadd.f32 %v555, %v556
        %v558 = vrot.slane %v557, 1
        %v559 = vadd.f32 %v557, %v558
        %v560 = vmul.f32 %v559, %v273
        %561 = vst [vmem:[%s236] sm:$0x4] %v560
        %v562 = vadd.f32 %v547, %v548
        %v563 = vadd.f32 %v562, %v549
        %v564 = vadd.f32 %v563, %v550
        %v565 = vrot.slane %v564, 4
        %v566 = vadd.f32 %v564, %v565
        %v567 = vrot.slane %v566, 2
        %v568 = vadd.f32 %v566, %v567
        %v569 = vrot.slane %v568, 1
        %v570 = vadd.f32 %v568, %v569
        %v571 = vmul.f32 %v570, %v273
        %572 = vst [vmem:[%s236 + $0x9] sm:$0x4] %v571
        %573 = vrot.lane.b32.xlu0 %v237, 1
        %v574 = vpop.permute.xlu0 %573
        %575 = vrot.lane.b32.xlu0 %v238, 1
        %v576 = vpop.permute.xlu0 %575
        %577 = vrot.lane.b32.xlu0 %v239, 1
        %v578 = vpop.permute.xlu0 %577
        %579 = vrot.lane.b32.xlu0 %v240, 1
        %v580 = vpop.permute.xlu0 %579
        %581 = vrot.lane.b32.xlu0 %v241, 1
        %v582 = vpop.permute.xlu0 %581
        %583 = vrot.lane.b32.xlu0 %v242, 1
        %v584 = vpop.permute.xlu0 %583
        %585 = vrot.lane.b32.xlu0 %v243, 1
        %v586 = vpop.permute.xlu0 %585
        %587 = vrot.lane.b32.xlu0 %v244, 1
        %v588 = vpop.permute.xlu0 %587
        %597 = vset.pattern.permute.xlu0 3
        %598 = vperm.xlu0 %597, %v265
        %v599 = vpop.permute.xlu0 %598
        %601 = vset.pattern.permute.xlu0 3
        %602 = vperm.xlu0 %601, %v266
        %v603 = vpop.permute.xlu0 %602
        %605 = vset.pattern.permute.xlu0 3
        %606 = vperm.xlu0 %605, %v267
        %v607 = vpop.permute.xlu0 %606
        %609 = vset.pattern.permute.xlu0 3
        %610 = vperm.xlu0 %609, %v268
        %v611 = vpop.permute.xlu0 %610
        %613 = vset.pattern.permute.xlu0 3
        %614 = vperm.xlu0 %613, %v269
        %v615 = vpop.permute.xlu0 %614
        %617 = vset.pattern.permute.xlu0 3
        %618 = vperm.xlu0 %617, %v270
        %v619 = vpop.permute.xlu0 %618
        %621 = vset.pattern.permute.xlu0 3
        %622 = vperm.xlu0 %621, %v271
        %v623 = vpop.permute.xlu0 %622
        %625 = vset.pattern.permute.xlu0 3
        %626 = vperm.xlu0 %625, %v272
        %v627 = vpop.permute.xlu0 %626
        %v629 = vmul.f32 %v257, %v599
        %v630 = vmul.f32 %v258, %v603
        %v631 = vmul.f32 %v259, %v607
        %v632 = vmul.f32 %v260, %v611
        %v633 = vmul.f32 %v261, %v615
        %v634 = vmul.f32 %v262, %v619
        %v635 = vmul.f32 %v263, %v623
        %v636 = vmul.f32 %v264, %v627
        %v637 = vmul.f32 %v629, %v574
        %v638 = vmul.f32 %v630, %v576
        %v639 = vmul.f32 %v631, %v578
        %v640 = vmul.f32 %v632, %v580
        %v641 = vmul.f32 %v633, %v582
        %v642 = vmul.f32 %v634, %v584
        %v643 = vmul.f32 %v635, %v586
        %v644 = vmul.f32 %v636, %v588
        %v645 = vadd.f32 %v637, %v638
        %v646 = vadd.f32 %v645, %v639
        %v647 = vadd.f32 %v646, %v640
        %v648 = vrot.slane %v647, 4
        %v649 = vadd.f32 %v647, %v648
        %v650 = vrot.slane %v649, 2
        %v651 = vadd.f32 %v649, %v650
        %v652 = vrot.slane %v651, 1
        %v653 = vadd.f32 %v651, %v652
        %v654 = vmul.f32 %v653, %v273
        %655 = vst [vmem:[%s236] sm:$0x8] %v654
        %v656 = vadd.f32 %v641, %v642
        %v657 = vadd.f32 %v656, %v643
        %v658 = vadd.f32 %v657, %v644
        %v659 = vrot.slane %v658, 4
        %v660 = vadd.f32 %v658, %v659
        %v661 = vrot.slane %v660, 2
        %v662 = vadd.f32 %v660, %v661
        %v663 = vrot.slane %v662, 1
        %v664 = vadd.f32 %v662, %v663
        %v665 = vmul.f32 %v664, %v273
        %666 = vst [vmem:[%s236 + $0x9] sm:$0x8] %v665
        %667 = vset.pattern.permute.xlu0 4
        %668 = vperm.xlu0 %667, %v265
        %v669 = vpop.permute.xlu0 %668
        %671 = vset.pattern.permute.xlu0 4
        %672 = vperm.xlu0 %671, %v266
        %v673 = vpop.permute.xlu0 %672
        %675 = vset.pattern.permute.xlu0 4
        %676 = vperm.xlu0 %675, %v267
        %v677 = vpop.permute.xlu0 %676
        %679 = vset.pattern.permute.xlu0 4
        %680 = vperm.xlu0 %679, %v268
        %v681 = vpop.permute.xlu0 %680
        %683 = vset.pattern.permute.xlu0 4
        %684 = vperm.xlu0 %683, %v269
        %v685 = vpop.permute.xlu0 %684
        %687 = vset.pattern.permute.xlu0 4
        %688 = vperm.xlu0 %687, %v270
        %v689 = vpop.permute.xlu0 %688
        %691 = vset.pattern.permute.xlu0 4
        %692 = vperm.xlu0 %691, %v271
        %v693 = vpop.permute.xlu0 %692
        %695 = vset.pattern.permute.xlu0 4
        %696 = vperm.xlu0 %695, %v272
        %v697 = vpop.permute.xlu0 %696
        %v699 = vmul.f32 %v257, %v669
        %v700 = vmul.f32 %v258, %v673
        %v701 = vmul.f32 %v259, %v677
        %v702 = vmul.f32 %v260, %v681
        %v703 = vmul.f32 %v261, %v685
        %v704 = vmul.f32 %v262, %v689
        %v705 = vmul.f32 %v263, %v693
        %v706 = vmul.f32 %v264, %v697
        %v707 = vmul.f32 %v699, %v237
        %v708 = vmul.f32 %v700, %v238
        %v709 = vmul.f32 %v701, %v239
        %v710 = vmul.f32 %v702, %v240
        %v711 = vmul.f32 %v703, %v241
        %v712 = vmul.f32 %v704, %v242
        %v713 = vmul.f32 %v705, %v243
        %v714 = vmul.f32 %v706, %v244
        %v715 = vadd.f32 %v707, %v708
        %v716 = vadd.f32 %v715, %v709
        %v717 = vadd.f32 %v716, %v710
        %v718 = vrot.slane %v717, 4
        %v719 = vadd.f32 %v717, %v718
        %v720 = vrot.slane %v719, 2
        %v721 = vadd.f32 %v719, %v720
        %v722 = vrot.slane %v721, 1
        %v723 = vadd.f32 %v721, %v722
        %v724 = vmul.f32 %v723, %v273
        %725 = vst [vmem:[%s236] sm:$0x10] %v724
        %v726 = vadd.f32 %v711, %v712
        %v727 = vadd.f32 %v726, %v713
        %v728 = vadd.f32 %v727, %v714
        %v729 = vrot.slane %v728, 4
        %v730 = vadd.f32 %v728, %v729
        %v731 = vrot.slane %v730, 2
        %v732 = vadd.f32 %v730, %v731
        %v733 = vrot.slane %v732, 1
        %v734 = vadd.f32 %v732, %v733
        %v735 = vmul.f32 %v734, %v273
        %736 = vst [vmem:[%s236 + $0x9] sm:$0x10] %v735
        %737 = vrot.lane.b32.xlu0 %v237, 127
        %v738 = vpop.permute.xlu0 %737
        %739 = vrot.lane.b32.xlu0 %v238, 127
        %v740 = vpop.permute.xlu0 %739
        %741 = vrot.lane.b32.xlu0 %v239, 127
        %v742 = vpop.permute.xlu0 %741
        %743 = vrot.lane.b32.xlu0 %v240, 127
        %v744 = vpop.permute.xlu0 %743
        %745 = vrot.lane.b32.xlu0 %v241, 127
        %v746 = vpop.permute.xlu0 %745
        %747 = vrot.lane.b32.xlu0 %v242, 127
        %v748 = vpop.permute.xlu0 %747
        %749 = vrot.lane.b32.xlu0 %v243, 127
        %v750 = vpop.permute.xlu0 %749
        %751 = vrot.lane.b32.xlu0 %v244, 127
        %v752 = vpop.permute.xlu0 %751
        %761 = vset.pattern.permute.xlu0 5
        %762 = vperm.xlu0 %761, %v265
        %v763 = vpop.permute.xlu0 %762
        %765 = vset.pattern.permute.xlu0 5
        %766 = vperm.xlu0 %765, %v266
        %v767 = vpop.permute.xlu0 %766
        %769 = vset.pattern.permute.xlu0 5
        %770 = vperm.xlu0 %769, %v267
        %v771 = vpop.permute.xlu0 %770
        %773 = vset.pattern.permute.xlu0 5
        %774 = vperm.xlu0 %773, %v268
        %v775 = vpop.permute.xlu0 %774
        %777 = vset.pattern.permute.xlu0 5
        %778 = vperm.xlu0 %777, %v269
        %v779 = vpop.permute.xlu0 %778
        %781 = vset.pattern.permute.xlu0 5
        %782 = vperm.xlu0 %781, %v270
        %v783 = vpop.permute.xlu0 %782
        %785 = vset.pattern.permute.xlu0 5
        %786 = vperm.xlu0 %785, %v271
        %v787 = vpop.permute.xlu0 %786
        %789 = vset.pattern.permute.xlu0 5
        %790 = vperm.xlu0 %789, %v272
        %v791 = vpop.permute.xlu0 %790
        %v793 = vmul.f32 %v257, %v763
        %v794 = vmul.f32 %v258, %v767
        %v795 = vmul.f32 %v259, %v771
        %v796 = vmul.f32 %v260, %v775
        %v797 = vmul.f32 %v261, %v779
        %v798 = vmul.f32 %v262, %v783
        %v799 = vmul.f32 %v263, %v787
        %v800 = vmul.f32 %v264, %v791
        %v801 = vmul.f32 %v793, %v738
        %v802 = vmul.f32 %v794, %v740
        %v803 = vmul.f32 %v795, %v742
        %v804 = vmul.f32 %v796, %v744
        %v805 = vmul.f32 %v797, %v746
        %v806 = vmul.f32 %v798, %v748
        %v807 = vmul.f32 %v799, %v750
        %v808 = vmul.f32 %v800, %v752
        %v809 = vadd.f32 %v801, %v802
        %v810 = vadd.f32 %v809, %v803
        %v811 = vadd.f32 %v810, %v804
        %v812 = vrot.slane %v811, 4
        %v813 = vadd.f32 %v811, %v812
        %v814 = vrot.slane %v813, 2
        %v815 = vadd.f32 %v813, %v814
        %v816 = vrot.slane %v815, 1
        %v817 = vadd.f32 %v815, %v816
        %v818 = vmul.f32 %v817, %v273
        %819 = vst [vmem:[%s236] sm:$0x20] %v818
        %v820 = vadd.f32 %v805, %v806
        %v821 = vadd.f32 %v820, %v807
        %v822 = vadd.f32 %v821, %v808
        %v823 = vrot.slane %v822, 4
        %v824 = vadd.f32 %v822, %v823
        %v825 = vrot.slane %v824, 2
        %v826 = vadd.f32 %v824, %v825
        %v827 = vrot.slane %v826, 1
        %v828 = vadd.f32 %v826, %v827
        %v829 = vmul.f32 %v828, %v273
        %830 = vst [vmem:[%s236 + $0x9] sm:$0x20] %v829
        %831 = vrot.lane.b32.xlu0 %v237, 121
        %v832 = vpop.permute.xlu0 %831
        %833 = vrot.lane.b32.xlu0 %v238, 121
        %v834 = vpop.permute.xlu0 %833
        %835 = vrot.lane.b32.xlu0 %v239, 121
        %v836 = vpop.permute.xlu0 %835
        %837 = vrot.lane.b32.xlu0 %v240, 121
        %v838 = vpop.permute.xlu0 %837
        %839 = vrot.lane.b32.xlu0 %v241, 121
        %v840 = vpop.permute.xlu0 %839
        %841 = vrot.lane.b32.xlu0 %v242, 121
        %v842 = vpop.permute.xlu0 %841
        %843 = vrot.lane.b32.xlu0 %v243, 121
        %v844 = vpop.permute.xlu0 %843
        %845 = vrot.lane.b32.xlu0 %v244, 121
        %v846 = vpop.permute.xlu0 %845
        %855 = vset.pattern.permute.xlu0 6
        %856 = vperm.xlu0 %855, %v265
        %v857 = vpop.permute.xlu0 %856
        %859 = vset.pattern.permute.xlu0 6
        %860 = vperm.xlu0 %859, %v266
        %v861 = vpop.permute.xlu0 %860
        %863 = vset.pattern.permute.xlu0 6
        %864 = vperm.xlu0 %863, %v267
        %v865 = vpop.permute.xlu0 %864
        %867 = vset.pattern.permute.xlu0 6
        %868 = vperm.xlu0 %867, %v268
        %v869 = vpop.permute.xlu0 %868
        %871 = vset.pattern.permute.xlu0 6
        %872 = vperm.xlu0 %871, %v269
        %v873 = vpop.permute.xlu0 %872
        %875 = vset.pattern.permute.xlu0 6
        %876 = vperm.xlu0 %875, %v270
        %v877 = vpop.permute.xlu0 %876
        %879 = vset.pattern.permute.xlu0 6
        %880 = vperm.xlu0 %879, %v271
        %v881 = vpop.permute.xlu0 %880
        %883 = vset.pattern.permute.xlu0 6
        %884 = vperm.xlu0 %883, %v272
        %v885 = vpop.permute.xlu0 %884
        %v887 = vmul.f32 %v257, %v857
        %v888 = vmul.f32 %v258, %v861
        %v889 = vmul.f32 %v259, %v865
        %v890 = vmul.f32 %v260, %v869
        %v891 = vmul.f32 %v261, %v873
        %v892 = vmul.f32 %v262, %v877
        %v893 = vmul.f32 %v263, %v881
        %v894 = vmul.f32 %v264, %v885
        %v895 = vmul.f32 %v887, %v832
        %v896 = vmul.f32 %v888, %v834
        %v897 = vmul.f32 %v889, %v836
        %v898 = vmul.f32 %v890, %v838
        %v899 = vmul.f32 %v891, %v840
        %v900 = vmul.f32 %v892, %v842
        %v901 = vmul.f32 %v893, %v844
        %v902 = vmul.f32 %v894, %v846
        %v903 = vadd.f32 %v895, %v896
        %v904 = vadd.f32 %v903, %v897
        %v905 = vadd.f32 %v904, %v898
        %v906 = vrot.slane %v905, 4
        %v907 = vadd.f32 %v905, %v906
        %v908 = vrot.slane %v907, 2
        %v909 = vadd.f32 %v907, %v908
        %v910 = vrot.slane %v909, 1
        %v911 = vadd.f32 %v909, %v910
        %v912 = vmul.f32 %v911, %v273
        %913 = vst [vmem:[%s236] sm:$0x40] %v912
        %v914 = vadd.f32 %v899, %v900
        %v915 = vadd.f32 %v914, %v901
        %v916 = vadd.f32 %v915, %v902
        %v917 = vrot.slane %v916, 4
        %v918 = vadd.f32 %v916, %v917
        %v919 = vrot.slane %v918, 2
        %v920 = vadd.f32 %v918, %v919
        %v921 = vrot.slane %v920, 1
        %v922 = vadd.f32 %v920, %v921
        %v923 = vmul.f32 %v922, %v273
        %924 = vst [vmem:[%s236 + $0x9] sm:$0x40] %v923
        %925 = vrot.lane.b32.xlu0 %v237, 120
        %v926 = vpop.permute.xlu0 %925
        %927 = vrot.lane.b32.xlu0 %v238, 120
        %v928 = vpop.permute.xlu0 %927
        %929 = vrot.lane.b32.xlu0 %v239, 120
        %v930 = vpop.permute.xlu0 %929
        %931 = vrot.lane.b32.xlu0 %v240, 120
        %v932 = vpop.permute.xlu0 %931
        %933 = vrot.lane.b32.xlu0 %v241, 120
        %v934 = vpop.permute.xlu0 %933
        %935 = vrot.lane.b32.xlu0 %v242, 120
        %v936 = vpop.permute.xlu0 %935
        %937 = vrot.lane.b32.xlu0 %v243, 120
        %v938 = vpop.permute.xlu0 %937
        %939 = vrot.lane.b32.xlu0 %v244, 120
        %v940 = vpop.permute.xlu0 %939
        %949 = vset.pattern.permute.xlu0 7
        %950 = vperm.xlu0 %949, %v265
        %v951 = vpop.permute.xlu0 %950
        %953 = vset.pattern.permute.xlu0 7
        %954 = vperm.xlu0 %953, %v266
        %v955 = vpop.permute.xlu0 %954
        %957 = vset.pattern.permute.xlu0 7
        %958 = vperm.xlu0 %957, %v267
        %v959 = vpop.permute.xlu0 %958
        %961 = vset.pattern.permute.xlu0 7
        %962 = vperm.xlu0 %961, %v268
        %v963 = vpop.permute.xlu0 %962
        %965 = vset.pattern.permute.xlu0 7
        %966 = vperm.xlu0 %965, %v269
        %v967 = vpop.permute.xlu0 %966
        %969 = vset.pattern.permute.xlu0 7
        %970 = vperm.xlu0 %969, %v270
        %v971 = vpop.permute.xlu0 %970
        %973 = vset.pattern.permute.xlu0 7
        %974 = vperm.xlu0 %973, %v271
        %v975 = vpop.permute.xlu0 %974
        %977 = vset.pattern.permute.xlu0 7
        %978 = vperm.xlu0 %977, %v272
        %v979 = vpop.permute.xlu0 %978
        %v981 = vmul.f32 %v257, %v951
        %v982 = vmul.f32 %v258, %v955
        %v983 = vmul.f32 %v259, %v959
        %v984 = vmul.f32 %v260, %v963
        %v985 = vmul.f32 %v261, %v967
        %v986 = vmul.f32 %v262, %v971
        %v987 = vmul.f32 %v263, %v975
        %v988 = vmul.f32 %v264, %v979
        %v989 = vmul.f32 %v981, %v926
        %v990 = vmul.f32 %v982, %v928
        %v991 = vmul.f32 %v983, %v930
        %v992 = vmul.f32 %v984, %v932
        %v993 = vmul.f32 %v985, %v934
        %v994 = vmul.f32 %v986, %v936
        %v995 = vmul.f32 %v987, %v938
        %v996 = vmul.f32 %v988, %v940
        %v997 = vadd.f32 %v989, %v990
        %v998 = vadd.f32 %v997, %v991
        %v999 = vadd.f32 %v998, %v992
        %v1000 = vrot.slane %v999, 4
        %v1001 = vadd.f32 %v999, %v1000
        %v1002 = vrot.slane %v1001, 2
        %v1003 = vadd.f32 %v1001, %v1002
        %v1004 = vrot.slane %v1003, 1
        %v1005 = vadd.f32 %v1003, %v1004
        %v1006 = vmul.f32 %v1005, %v273
        %1007 = vst [vmem:[%s236] sm:$0x80] %v1006
        %v1008 = vadd.f32 %v993, %v994
        %v1009 = vadd.f32 %v1008, %v995
        %v1010 = vadd.f32 %v1009, %v996
        %v1011 = vrot.slane %v1010, 4
        %v1012 = vadd.f32 %v1010, %v1011
        %v1013 = vrot.slane %v1012, 2
        %v1014 = vadd.f32 %v1012, %v1013
        %v1015 = vrot.slane %v1014, 1
        %v1016 = vadd.f32 %v1014, %v1015
        %v1017 = vmul.f32 %v1016, %v273
        %1018 = vst [vmem:[%s236 + $0x9] sm:$0x80] %v1017
        %1019 = vrot.lane.b32.xlu0 %v237, 119
        %v1020 = vpop.permute.xlu0 %1019
        %1021 = vrot.lane.b32.xlu0 %v238, 119
        %v1022 = vpop.permute.xlu0 %1021
        %1023 = vrot.lane.b32.xlu0 %v239, 119
        %v1024 = vpop.permute.xlu0 %1023
        %1025 = vrot.lane.b32.xlu0 %v240, 119
        %v1026 = vpop.permute.xlu0 %1025
        %1027 = vrot.lane.b32.xlu0 %v241, 119
        %v1028 = vpop.permute.xlu0 %1027
        %1029 = vrot.lane.b32.xlu0 %v242, 119
        %v1030 = vpop.permute.xlu0 %1029
        %1031 = vrot.lane.b32.xlu0 %v243, 119
        %v1032 = vpop.permute.xlu0 %1031
        %1033 = vrot.lane.b32.xlu0 %v244, 119
        %v1034 = vpop.permute.xlu0 %1033
        %1043 = vset.pattern.permute.xlu0 8
        %1044 = vperm.xlu0 %1043, %v265
        %v1045 = vpop.permute.xlu0 %1044
        %1047 = vset.pattern.permute.xlu0 8
        %1048 = vperm.xlu0 %1047, %v266
        %v1049 = vpop.permute.xlu0 %1048
        %1051 = vset.pattern.permute.xlu0 8
        %1052 = vperm.xlu0 %1051, %v267
        %v1053 = vpop.permute.xlu0 %1052
        %1055 = vset.pattern.permute.xlu0 8
        %1056 = vperm.xlu0 %1055, %v268
        %v1057 = vpop.permute.xlu0 %1056
        %1059 = vset.pattern.permute.xlu0 8
        %1060 = vperm.xlu0 %1059, %v269
        %v1061 = vpop.permute.xlu0 %1060
        %1063 = vset.pattern.permute.xlu0 8
        %1064 = vperm.xlu0 %1063, %v270
        %v1065 = vpop.permute.xlu0 %1064
        %1067 = vset.pattern.permute.xlu0 8
        %1068 = vperm.xlu0 %1067, %v271
        %v1069 = vpop.permute.xlu0 %1068
        %1071 = vset.pattern.permute.xlu0 8
        %1072 = vperm.xlu0 %1071, %v272
        %v1073 = vpop.permute.xlu0 %1072
        %v1075 = vmul.f32 %v257, %v1045
        %v1076 = vmul.f32 %v258, %v1049
        %v1077 = vmul.f32 %v259, %v1053
        %v1078 = vmul.f32 %v260, %v1057
        %v1079 = vmul.f32 %v261, %v1061
        %v1080 = vmul.f32 %v262, %v1065
        %v1081 = vmul.f32 %v263, %v1069
        %v1082 = vmul.f32 %v264, %v1073
        %v1083 = vmul.f32 %v1075, %v1020
        %v1084 = vmul.f32 %v1076, %v1022
        %v1085 = vmul.f32 %v1077, %v1024
        %v1086 = vmul.f32 %v1078, %v1026
        %v1087 = vmul.f32 %v1079, %v1028
        %v1088 = vmul.f32 %v1080, %v1030
        %v1089 = vmul.f32 %v1081, %v1032
        %v1090 = vmul.f32 %v1082, %v1034
        %v1091 = vadd.f32 %v1083, %v1084
        %v1092 = vadd.f32 %v1091, %v1085
        %v1093 = vadd.f32 %v1092, %v1086
        %v1094 = vrot.slane %v1093, 4
        %v1095 = vadd.f32 %v1093, %v1094
        %v1096 = vrot.slane %v1095, 2
        %v1097 = vadd.f32 %v1095, %v1096
        %v1098 = vrot.slane %v1097, 1
        %v1099 = vadd.f32 %v1097, %v1098
        %v1100 = vmul.f32 %v1099, %v274
        %1101 = vst [vmem:[%s236 + $0x8] sm:$0x1] %v1100
        %v1102 = vadd.f32 %v1087, %v1088
        %v1103 = vadd.f32 %v1102, %v1089
        %v1104 = vadd.f32 %v1103, %v1090
        %v1105 = vrot.slane %v1104, 4
        %v1106 = vadd.f32 %v1104, %v1105
        %v1107 = vrot.slane %v1106, 2
        %v1108 = vadd.f32 %v1106, %v1107
        %v1109 = vrot.slane %v1108, 1
        %v1110 = vadd.f32 %v1108, %v1109
        %v1111 = vmul.f32 %v1110, %v274
        %1112 = vst [vmem:[%s236 + $0x11] sm:$0x1] %v1111
        %1113 = vst [vmem:[#allocation2] sm:$0xff] %v237
        %1114 = vst [vmem:[#allocation2 + $0x8] sm:$0xff] %v238
        %1115 = vst [vmem:[#allocation2 + $0x10] sm:$0xff] %v239
        %1116 = vst [vmem:[#allocation2 + $0x18] sm:$0xff] %v240
        %1117 = vst [vmem:[#allocation2 + $0x20] sm:$0xff] %v241
        %1118 = vst [vmem:[#allocation2 + $0x28] sm:$0xff] %v242
        %1119 = vst [vmem:[#allocation2 + $0x30] sm:$0xff] %v243
        %1120 = vst [vmem:[#allocation2 + $0x38] sm:$0xff] %v244
        %p1121 = scmp.lt.s32.totalorder %s21, 1
        %s1122 = scalar_select %p1121, %s21, 1
        %p1123 = scmp.lt.s32.totalorder %s22, 3
        %s1124 = scalar_select %p1123, %s22, 3
        %s1125 = smul.addr %s1124, 3
        %s1126 = smul.addr %s1122, 12
        %s1127 = sadd.s32 %s1125, %s1126
        %s1128 = smul.addr %s1127, 8
        %s1129 = scalar_lea.vmem %s3, %s1128
        // Predicated region
        $region41: #{tpu_custom_call.1} parent=31 // pred_check
          %p1130 = pneg %p124
        $region42: #{tpu_custom_call.1} parent=31 // pred_check_branch
          %1132 = sbr.rel (%p1130) target = $region44
        $region43: #{tpu_custom_call.1} parent=31 // pred_region
          _
        $region44: #{tpu_custom_call.1} parent=31 // pred_fallthru
          _
      $region32: #{tpu_custom_call.1} parent=5 // pred_fallthru
        _
      %p1133 = scmp.le.s32.totalorder 2, %s12
      // Predicated region
      $region45: #{tpu_custom_call.1} parent=5 // pred_check
        %p1134 = pneg %p1133
      $region46: #{tpu_custom_call.1} parent=5 // pred_check_branch
        %1136 = sbr.rel (%p1134) target = $region48
      $region47: #{tpu_custom_call.1} parent=5 // pred_region
        %s1137 = ssub.s32 %s12, 2
        // Predicated region
        $region49: #{tpu_custom_call.1} parent=47 // pred_check
          %p1138 = pneg %p130
        $region50: #{tpu_custom_call.1} parent=47 // pred_check_branch
          %1140 = sbr.rel (%p1138) target = $region52
        $region51: #{tpu_custom_call.1} parent=47 // pred_region
          %p1141 = scmp.lt.s32.totalorder %s23, 1
          %s1142 = scalar_select %p1141, %s23, 1
          %p1143 = scmp.lt.s32.totalorder %s24, 3
          %s1144 = scalar_select %p1143, %s24, 3
          %s1145 = smul.addr %s1144, 3
          %s1146 = smul.addr %s1142, 12
          %s1147 = sadd.s32 %s1145, %s1146
          %s1148 = smul.addr %s1147, 8
          %s1149 = scalar_lea.vmem %s3, %s1148
        $region52: #{tpu_custom_call.1} parent=47 // pred_fallthru
          _
      $region48: #{tpu_custom_call.1} parent=5 // pred_fallthru
        _
    $region6: #{tpu_custom_call.1} parent=1 // loop_footer
      %s16 = sadd.s32 1, %s12
    $region7: #{tpu_custom_call.1} parent=1 // loop_footer_branch
      %11 = sbr.rel target = $region3
    $region8: #{tpu_custom_call.1} parent=1 // loop_exit
      _
    %1150 = vsyncpa [#allocation4], 1
    %s1151 = scalar_lea.sflag [#allocation4], 1
    %1152 = vsyncpa %s1151, 1

</llo_original>
